<compile_context>
chip_gen: v5e
topology: v5e:2x2
jax: 0.10.0
libtpu: 0.0.40
codegen_flags: <defaults>
</compile_context>

<pallas_src>
import math

import jax
import jax.numpy as jnp
from jax.experimental import pallas as pl
from jax.experimental.pallas import tpu as pltpu


# ---------------------------------------------------------------------------
# Kernels
# ---------------------------------------------------------------------------

def _sage_layer1_kernel(cnt_ref, xk_ref, xi_ref, dinv_ref, w_ref, b_ref,
                        h_ref, acc_ref):
    """h = relu( mean_agg(X) @ W1_l^T + b1 + X @ W1_r^T ), tiled over (rows, K)."""
    k = pl.program_id(1)
    nk = pl.num_programs(1)
    cw = xk_ref.shape[-1]                       # cin_p (static)

    partial = jnp.dot(cnt_ref[...], xk_ref[...],
                      preferred_element_type=jnp.float32)

    @pl.when(k == 0)
    def _():
        # Fast path: write the first partial directly (no zero-init + RMW) and
        # stage the self-features into the stacked accumulator columns.
        acc_ref[:, :cw] = partial
        acc_ref[:, cw:] = xi_ref[...].astype(jnp.float32)

    @pl.when(k > 0)
    def _():
        acc_ref[:, :cw] += partial

    @pl.when(k == nk - 1)
    def _():
        # Exact-count aggregation -> f32 per-row mean normalization.
        acc_ref[:, :cw] = acc_ref[:, :cw] * dinv_ref[...]
        # Single stacked matmul [agg | x_self] @ [W1_l^T ; W1_r^T].
        stacked = acc_ref[...].astype(jnp.bfloat16)
        h = jnp.dot(stacked, w_ref[...],
                    preferred_element_type=jnp.float32) + b_ref[...]
        h_ref[...] = jnp.maximum(h, 0.0).astype(h_ref.dtype)


def _sage_layer2_kernel(cnt_ref, hk_ref, hi_ref, xi_ref, dinv_ref, w_ref, b_ref,
                        o_ref, acc_ref):
    """out = relu( mean_agg(H) @ W2_l^T + b2 + H @ W2_r^T + fc(X) )."""
    k = pl.program_id(1)
    nk = pl.num_programs(1)
    ch = hk_ref.shape[-1]                       # chid_p (static)

    partial = jnp.dot(cnt_ref[...], hk_ref[...],
                      preferred_element_type=jnp.float32)

    @pl.when(k == 0)
    def _():
        acc_ref[:, :ch] = partial
        acc_ref[:, ch:2 * ch] = hi_ref[...].astype(jnp.float32)
        acc_ref[:, 2 * ch:] = xi_ref[...].astype(jnp.float32)

    @pl.when(k > 0)
    def _():
        acc_ref[:, :ch] += partial

    @pl.when(k == nk - 1)
    def _():
        acc_ref[:, :ch] = acc_ref[:, :ch] * dinv_ref[...]
        # Single stacked matmul [agg | h_self | x_skip] @ [W2_l^T;W2_r^T;fc_w^T]
        # with the combined bias (b2 + fc_b); skip path fused, final ReLU here.
        stacked = acc_ref[...].astype(jnp.bfloat16)
        y = jnp.dot(stacked, w_ref[...],
                    preferred_element_type=jnp.float32) + b_ref[...]
        o_ref[...] = jnp.maximum(y, 0.0).astype(o_ref.dtype)


# ---------------------------------------------------------------------------
# Wrapper
# ---------------------------------------------------------------------------

def _round_up(v, m):
    return ((v + m - 1) // m) * m


def _pick_tile(n_pad, candidates):
    for c in candidates:
        if c <= n_pad and n_pad % c == 0:
            return c
    return n_pad


def _pad2(x, rows, cols, dtype):
    x = x.astype(jnp.float32)
    return jnp.pad(x, ((0, rows - x.shape[0]), (0, cols - x.shape[1]))).astype(dtype)


def _bspec(shape, index_map, single_buffer=False):
    """BlockSpec; grid-invariant operands are single-buffered to save VMEM."""
    if single_buffer:
        try:
            return pl.BlockSpec(shape, index_map, pipeline_mode=pl.Buffered(1))
        except (TypeError, AttributeError):     # fall back on older jax
            pass
    return pl.BlockSpec(shape, index_map)


def _device_kind():
    try:
        return jax.devices()[0].device_kind.lower()
    except Exception:
        return ""


def graphsage_forward(x, edge_index, params):
    """x: [N, Cin] f32, edge_index: [2, E] int32, params: dict of f32 weights."""
    n, cin = x.shape
    chid = params["w1_l"].shape[0]
    cout = params["fc_w"].shape[0]

    n_pad = _round_up(n, 128)
    cin_p = _round_up(cin, 128)
    chid_p = _round_up(chid, 128)
    cout_p = _round_up(cout, 128)

    # ---- glue (plain JAX): exact edge counts + per-row 1/deg ----------------
    # counts is built directly at padded shape in bf16 (exact integers < 256);
    # deg is an O(E) scatter; the 1/deg scale is applied in-kernel in f32.
    # TODO(synk): CSR / scalar-prefetch gather formulation for production N.
    src = edge_index[0].astype(jnp.int32)
    dst = edge_index[1].astype(jnp.int32)
    counts = jnp.zeros((n_pad, n_pad), jnp.bfloat16).at[dst, src].add(1.0)
    deg = jnp.zeros((n_pad, 1), jnp.float32).at[dst, 0].add(1.0)
    deg_inv = 1.0 / jnp.maximum(deg, 1.0)       # empty neighborhoods stay 0

    x_p = _pad2(x, n_pad, cin_p, jnp.bfloat16)

    # Pre-transposed, zero-padded, ROW-STACKED bf16 weights -> one wide-K
    # epilogue matmul per layer (no in-kernel transpose / relayout).
    w1_stack = jnp.concatenate(
        [_pad2(params["w1_l"].T, cin_p, chid_p, jnp.bfloat16),
         _pad2(params["w1_r"].T, cin_p, chid_p, jnp.bfloat16)], axis=0)
    b1_p = _pad2(params["b1_l"], 1, chid_p, jnp.float32)
    w2_stack = jnp.concatenate(
        [_pad2(params["w2_l"].T, chid_p, cout_p, jnp.bfloat16),
         _pad2(params["w2_r"].T, chid_p, cout_p, jnp.bfloat16),
         _pad2(params["fc_w"].T, cin_p, cout_p, jnp.bfloat16)], axis=0)
    b2_p = (_pad2(params["b2_l"], 1, cout_p, jnp.float32)
            + _pad2(params["fc_b"], 1, cout_p, jnp.float32))   # combined bias

    # ---- tiling / per-generation VMEM budget ---------------------------------
    kind = _device_kind()
    is_v7x = "v7" in kind
    vmem_limit = (48 if is_v7x else 64) * 1024 * 1024   # v7x: only 64 MiB physical

    tm = _pick_tile(n_pad, (512, 256, 128))
    # v7x megacore: keep an even row-tile count so the "parallel" axis splits
    # evenly across the two TensorCores.
    if (is_v7x and n_pad > tm and (n_pad // tm) % 2 == 1 and tm > 128
            and n_pad % (tm // 2) == 0):
        tm //= 2

    # Neighbor operand (X layer 1 / H layer 2): fully VMEM-resident (tk = n_pad,
    # constant block index, single-buffered -> DMA'd exactly once) when it and
    # the double-buffered counts row-strip fit the budget; else tile over k.
    nb_bytes = n_pad * max(cin_p, chid_p) * 2
    a_strip_bytes = 2 * tm * n_pad * 2
    if nb_bytes <= 8 * 1024 * 1024 and nb_bytes + a_strip_bytes <= vmem_limit // 2:
        tk = n_pad
    else:
        tk = _pick_tile(n_pad, (1024, 512, 256, 128))
    nb_resident = (tk == n_pad)
    grid = (n_pad // tm, n_pad // tk)

    cparams = pltpu.CompilerParams(
        dimension_semantics=("parallel", "arbitrary"),
        vmem_limit_bytes=vmem_limit,
    )

    def _bytes(*shapes_dtypes):
        return int(sum(math.prod(s) * jnp.dtype(d).itemsize for s, d in shapes_dtypes))

    # ---- layer 1: h = relu(SAGEConv_in->hid(x)) ------------------------------
    cost1 = pl.CostEstimate(
        flops=2 * n_pad * n_pad * cin_p + 2 * n_pad * (2 * cin_p) * chid_p,
        transcendentals=0,
        bytes_accessed=_bytes(((n_pad, n_pad), jnp.bfloat16),
                              ((n_pad, cin_p), jnp.bfloat16),
                              ((n_pad, cin_p), jnp.bfloat16),
                              ((n_pad, 1), jnp.float32),
                              ((2 * cin_p, chid_p), jnp.bfloat16),
                              ((n_pad, chid_p), jnp.bfloat16)),
    )
    h_p = pl.pallas_call(
        _sage_layer1_kernel,
        out_shape=jax.ShapeDtypeStruct((n_pad, chid_p), jnp.bfloat16),
        grid_spec=pltpu.PrefetchScalarGridSpec(
            num_scalar_prefetch=0,
            grid=grid,
            in_specs=[
                _bspec((tm, tk), lambda i, k: (i, k)),                  # counts tile
                _bspec((tk, cin_p), lambda i, k: (k, 0),
                       single_buffer=nb_resident),                     # X (neighbor)
                _bspec((tm, cin_p), lambda i, k: (i, 0)),               # X (self)
                _bspec((tm, 1), lambda i, k: (i, 0)),                   # 1/deg
                _bspec((2 * cin_p, chid_p), lambda i, k: (0, 0),
                       single_buffer=True),                             # [W1_l;W1_r]^T
                _bspec((1, chid_p), lambda i, k: (0, 0),
                       single_buffer=True),                             # b1
            ],
            out_specs=pl.BlockSpec((tm, chid_p), lambda i, k: (i, 0)),
            scratch_shapes=[pltpu.VMEM((tm, 2 * cin_p), jnp.float32)],
        ),
        compiler_params=cparams,
        cost_estimate=cost1,
    )(counts, x_p, x_p, deg_inv, w1_stack, b1_p)

    # dropout(p=0.3) is identity at inference.

    # ---- layer 2: out = relu(SAGEConv_hid->out(h) + fc(x)) -------------------
    cost2 = pl.CostEstimate(
        flops=2 * n_pad * n_pad * chid_p
              + 2 * n_pad * (2 * chid_p + cin_p) * cout_p,
        transcendentals=0,
        bytes_accessed=_bytes(((n_pad, n_pad), jnp.bfloat16),
                              ((n_pad, chid_p), jnp.bfloat16),
                              ((n_pad, chid_p), jnp.bfloat16),
                              ((n_pad, cin_p), jnp.bfloat16),
                              ((n_pad, 1), jnp.float32),
                              ((2 * chid_p + cin_p, cout_p), jnp.bfloat16),
                              ((n_pad, cout_p), jnp.float32)),
    )
    out_p = pl.pallas_call(
        _sage_layer2_kernel,
        out_shape=jax.ShapeDtypeStruct((n_pad, cout_p), jnp.float32),
        grid_spec=pltpu.PrefetchScalarGridSpec(
            num_scalar_prefetch=0,
            grid=grid,
            in_specs=[
                _bspec((tm, tk), lambda i, k: (i, k)),                  # counts tile
                _bspec((tk, chid_p), lambda i, k: (k, 0),
                       single_buffer=nb_resident),                     # H (neighbor)
                _bspec((tm, chid_p), lambda i, k: (i, 0)),              # H (self)
                _bspec((tm, cin_p), lambda i, k: (i, 0)),               # X (skip path)
                _bspec((tm, 1), lambda i, k: (i, 0)),                   # 1/deg
                _bspec((2 * chid_p + cin_p, cout_p), lambda i, k: (0, 0),
                       single_buffer=True),                             # [W2_l;W2_r;fc_w]^T
                _bspec((1, cout_p), lambda i, k: (0, 0),
                       single_buffer=True),                             # b2 + fc_b
            ],
            out_specs=pl.BlockSpec((tm, cout_p), lambda i, k: (i, 0)),
            scratch_shapes=[pltpu.VMEM((tm, 2 * chid_p + cin_p), jnp.float32)],
        ),
        compiler_params=cparams,
        cost_estimate=cost2,
    )(counts, h_p, h_p, x_p, deg_inv, w2_stack, b2_p)

    return out_p[:n, :cout]


# ---------------------------------------------------------------------------
# Params / reference / driver
# ---------------------------------------------------------------------------

def init_params(key, in_channels, hidden_channels, out_channels):
    ks = jax.random.split(key, 8)
    s = 0.1
    return {
        # nn.Linear(in, out): weight [out, in], bias kept 2D [1, out]
        "fc_w": s * jax.random.normal(ks[0], (out_channels, in_channels), jnp.float32),
        "fc_b": s * jax.random.normal(ks[1], (1, out_channels), jnp.float32),
        # SAGEConv(in, hidden): lin_l (with bias), lin_r (no bias)
        "w1_l": s * jax.random.normal(ks[2], (hidden_channels, in_channels), jnp.float32),
        "b1_l": s * jax.random.normal(ks[3], (1, hidden_channels), jnp.float32),
        "w1_r": s * jax.random.normal(ks[4], (hidden_channels, in_channels), jnp.float32),
        # SAGEConv(hidden, out)
        "w2_l": s * jax.random.normal(ks[5], (out_channels, hidden_channels), jnp.float32),
        "b2_l": s * jax.random.normal(ks[6], (1, out_channels), jnp.float32),
        "w2_r": s * jax.random.normal(ks[7], (out_channels, hidden_channels), jnp.float32),
    }


def _reference(x, edge_index, params):
    """Pure-JAX f32 reference of the PyTorch forward pass."""
    n = x.shape[0]
    src, dst = edge_index[0], edge_index[1]
    counts = jnp.zeros((n, n), jnp.float32).at[dst, src].add(1.0)
    deg = counts.sum(axis=1, keepdims=True)
    a = counts / jnp.maximum(deg, 1.0)
    inp = x @ params["fc_w"].T + params["fc_b"]
    h = jnp.maximum(a @ x @ params["w1_l"].T + params["b1_l"] + x @ params["w1_r"].T, 0.0)
    y = a @ h @ params["w2_l"].T + params["b2_l"] + h @ params["w2_r"].T
    return jnp.maximum(y + inp, 0.0)


if __name__ == "__main__":
    N = 16            # nodes
    IN_C = 8          # in_channels
    HID_C = 32        # hidden_channels
    OUT_C = 16        # out_channels
    E = 48            # edges

    key = jax.random.PRNGKey(0)
    k_x, k_e, k_p = jax.random.split(key, 3)

    x = jax.random.normal(k_x, (N, IN_C), jnp.float32)
    edge_index = jax.random.randint(k_e, (2, E), 0, N, jnp.int32)
    params = init_params(k_p, IN_C, HID_C, OUT_C)

    out = jax.jit(graphsage_forward)(x, edge_index, params)
    out = jax.block_until_ready(out)

    assert out.shape == (N, OUT_C) and out.dtype == jnp.float32
    ref = _reference(x, edge_index, params)
    max_err = float(jnp.max(jnp.abs(out - ref)))
    # bf16 MXU inputs (exact counts, f32 1/deg scale, f32 accumulation) vs f32 ref.
    assert max_err < 0.1, f"max abs error vs f32 reference too large: {max_err}"

    print("KERNEL_OK")
</pallas_src>

<mosaic_0001>
module attributes {stable_mosaic.version = 11 : i64} {
  func.func @_sage_layer1_kernel(%arg0: i32, %arg1: i32, %arg2: memref<128x128xbf16, #tpu.memory_space<vmem>>, %arg3: memref<128x128xbf16, #tpu.memory_space<vmem>>, %arg4: memref<128x128xbf16, #tpu.memory_space<vmem>>, %arg5: memref<128x1xf32, #tpu.memory_space<vmem>>, %arg6: memref<256x128xbf16, #tpu.memory_space<vmem>>, %arg7: memref<1x128xf32, #tpu.memory_space<vmem>>, %arg8: memref<128x128xbf16, #tpu.memory_space<vmem>>, %arg9: memref<128x256xf32, #tpu.memory_space<vmem>>) attributes {dimension_semantics = [#tpu.dimension_semantics<parallel>, #tpu.dimension_semantics<arbitrary>], iteration_bounds = array<i64: 1, 1>, scalar_prefetch = 0 : i64, scratch_operands = 1 : i64, tpu.core_type = #tpu.core_type<tc>, window_params = [{transform_indices = @transform_0, window_bounds = array<i64: 128, 128>}, {pipeline_mode = #tpu.pipeline_mode<synchronous>, transform_indices = @transform_1, window_bounds = array<i64: 128, 128>}, {transform_indices = @transform_2, window_bounds = array<i64: 128, 128>}, {transform_indices = @transform_3, window_bounds = array<i64: 128, 1>}, {pipeline_mode = #tpu.pipeline_mode<synchronous>, transform_indices = @transform_4, window_bounds = array<i64: 256, 128>}, {pipeline_mode = #tpu.pipeline_mode<synchronous>, transform_indices = @transform_5, window_bounds = array<i64: 1, 128>}, {transform_indices = @transform_6, window_bounds = array<i64: 128, 128>}]} {
    %c0 = arith.constant 0 : index
    %c0_0 = arith.constant 0 : index
    %0 = vector.load %arg2[%c0, %c0_0] : memref<128x128xbf16, #tpu.memory_space<vmem>>, vector<128x128xbf16>
    %c0_1 = arith.constant 0 : index
    %c0_2 = arith.constant 0 : index
    %1 = vector.load %arg3[%c0_1, %c0_2] : memref<128x128xbf16, #tpu.memory_space<vmem>>, vector<128x128xbf16>
    %cst = arith.constant dense<0.000000e+00> : vector<128x128xf32>
    %2 = tpu.matmul %0, %1, %cst {dimension_numbers = #tpu.dot_dimension_numbers<[1], [0], [0], [1], [0, 0, 1, 1], [], []>} : vector<128x128xbf16>, vector<128x128xbf16>, vector<128x128xf32> -> vector<128x128xf32>
    %c0_i32 = arith.constant 0 : i32
    %3 = arith.cmpi eq, %arg1, %c0_i32 : i32
    %4 = arith.extui %3 : i1 to i32
    %c0_i32_3 = arith.constant 0 : i32
    %5 = arith.cmpi ne, %4, %c0_i32_3 : i32
    scf.if %5 {
      %c0_8 = arith.constant 0 : index
      %c0_9 = arith.constant 0 : index
      %12 = vector.load %arg9[%c0_8, %c0_9] : memref<128x256xf32, #tpu.memory_space<vmem>>, vector<128x128xf32>
      tpu.vector_store %arg9[%c0_8, %c0_9], %2 {strides = array<i32>} : memref<128x256xf32, #tpu.memory_space<vmem>>, vector<128x128xf32>,
      %c0_10 = arith.constant 0 : index
      %c0_11 = arith.constant 0 : index
      %13 = vector.load %arg4[%c0_10, %c0_11] : memref<128x128xbf16, #tpu.memory_space<vmem>>, vector<128x128xbf16>
      %14 = arith.extf %13 : vector<128x128xbf16> to vector<128x128xf32>
      %c0_12 = arith.constant 0 : index
      %c128 = arith.constant 128 : index
      %15 = vector.load %arg9[%c0_12, %c128] : memref<128x256xf32, #tpu.memory_space<vmem>>, vector<128x128xf32>
      tpu.vector_store %arg9[%c0_12, %c128], %14 {strides = array<i32>} : memref<128x256xf32, #tpu.memory_space<vmem>>, vector<128x128xf32>,
    } else {
    }
    %c0_i32_4 = arith.constant 0 : i32
    %6 = arith.cmpi sgt, %arg1, %c0_i32_4 : i32
    %7 = arith.extui %6 : i1 to i32
    %c0_i32_5 = arith.constant 0 : i32
    %8 = arith.cmpi ne, %7, %c0_i32_5 : i32
    scf.if %8 {
      %c0_8 = arith.constant 0 : index
      %c0_9 = arith.constant 0 : index
      %12 = vector.load %arg9[%c0_8, %c0_9] : memref<128x256xf32, #tpu.memory_space<vmem>>, vector<128x128xf32>
      %13 = arith.addf %12, %2 : vector<128x128xf32>
      %c0_10 = arith.constant 0 : index
      %c0_11 = arith.constant 0 : index
      %14 = vector.load %arg9[%c0_10, %c0_11] : memref<128x256xf32, #tpu.memory_space<vmem>>, vector<128x128xf32>
      tpu.vector_store %arg9[%c0_10, %c0_11], %13 {strides = array<i32>} : memref<128x256xf32, #tpu.memory_space<vmem>>, vector<128x128xf32>,
    } else {
    }
    %c0_i32_6 = arith.constant 0 : i32
    %9 = arith.cmpi eq, %arg1, %c0_i32_6 : i32
    %10 = arith.extui %9 : i1 to i32
    %c0_i32_7 = arith.constant 0 : i32
    %11 = arith.cmpi ne, %10, %c0_i32_7 : i32
    scf.if %11 {
      %c0_8 = arith.constant 0 : index
      %c0_9 = arith.constant 0 : index
      %12 = vector.load %arg9[%c0_8, %c0_9] : memref<128x256xf32, #tpu.memory_space<vmem>>, vector<128x128xf32>
      %c0_10 = arith.constant 0 : index
      %c0_11 = arith.constant 0 : index
      %13 = vector.load %arg5[%c0_10, %c0_11] : memref<128x1xf32, #tpu.memory_space<vmem>>, vector<128x1xf32>
      %14 = vector.broadcast %13 : vector<128x1xf32> to vector<128x128xf32>
      %15 = arith.mulf %12, %14 : vector<128x128xf32>
      %c0_12 = arith.constant 0 : index
      %c0_13 = arith.constant 0 : index
      %16 = vector.load %arg9[%c0_12, %c0_13] : memref<128x256xf32, #tpu.memory_space<vmem>>, vector<128x128xf32>
      tpu.vector_store %arg9[%c0_12, %c0_13], %15 {strides = array<i32>} : memref<128x256xf32, #tpu.memory_space<vmem>>, vector<128x128xf32>,
      %c0_14 = arith.constant 0 : index
      %c0_15 = arith.constant 0 : index
      %17 = vector.load %arg9[%c0_14, %c0_15] : memref<128x256xf32, #tpu.memory_space<vmem>>, vector<128x256xf32>
      %18 = arith.truncf %17 : vector<128x256xf32> to vector<128x256xbf16>
      %c0_16 = arith.constant 0 : index
      %c0_17 = arith.constant 0 : index
      %19 = vector.load %arg6[%c0_16, %c0_17] : memref<256x128xbf16, #tpu.memory_space<vmem>>, vector<256x128xbf16>
      %cst_18 = arith.constant dense<0.000000e+00> : vector<128x128xf32>
      %20 = tpu.matmul %18, %19, %cst_18 {dimension_numbers = #tpu.dot_dimension_numbers<[1], [0], [0], [1], [0, 0, 1, 1], [], []>} : vector<128x256xbf16>, vector<256x128xbf16>, vector<128x128xf32> -> vector<128x128xf32>
      %c0_19 = arith.constant 0 : index
      %c0_20 = arith.constant 0 : index
      %21 = vector.load %arg7[%c0_19, %c0_20] : memref<1x128xf32, #tpu.memory_space<vmem>>, vector<1x128xf32>
      %22 = vector.broadcast %21 : vector<1x128xf32> to vector<128x128xf32>
      %23 = arith.addf %20, %22 : vector<128x128xf32>
      %cst_21 = arith.constant 0.000000e+00 : f32
      %24 = vector.broadcast %cst_21 : f32 to vector<128x128xf32>
      %25 = arith.maximumf %23, %24 : vector<128x128xf32>
      %26 = arith.truncf %25 : vector<128x128xf32> to vector<128x128xbf16>
      %c0_22 = arith.constant 0 : index
      %c0_23 = arith.constant 0 : index
      %27 = vector.load %arg8[%c0_22, %c0_23] : memref<128x128xbf16, #tpu.memory_space<vmem>>, vector<128x128xbf16>
      tpu.vector_store %arg8[%c0_22, %c0_23], %26 {strides = array<i32>} : memref<128x128xbf16, #tpu.memory_space<vmem>>, vector<128x128xbf16>,
    } else {
    }
    return
  }
  func.func @transform_0(%arg0: i32, %arg1: i32) -> (i32, i32) {
    %c0_i32 = arith.constant 0 : i32
    return %arg0, %arg1 : i32, i32
  }
  func.func @transform_1(%arg0: i32, %arg1: i32) -> (i32, i32) {
    %c0_i32 = arith.constant 0 : i32
    %c0_i32_0 = arith.constant 0 : i32
    return %arg1, %c0_i32 : i32, i32
  }
  func.func @transform_2(%arg0: i32, %arg1: i32) -> (i32, i32) {
    %c0_i32 = arith.constant 0 : i32
    %c0_i32_0 = arith.constant 0 : i32
    return %arg0, %c0_i32 : i32, i32
  }
  func.func @transform_3(%arg0: i32, %arg1: i32) -> (i32, i32) {
    %c0_i32 = arith.constant 0 : i32
    %c0_i32_0 = arith.constant 0 : i32
    return %arg0, %c0_i32 : i32, i32
  }
  func.func @transform_4(%arg0: i32, %arg1: i32) -> (i32, i32) {
    %c0_i32 = arith.constant 0 : i32
    %c0_i32_0 = arith.constant 0 : i32
    %c0_i32_1 = arith.constant 0 : i32
    return %c0_i32, %c0_i32_0 : i32, i32
  }
  func.func @transform_5(%arg0: i32, %arg1: i32) -> (i32, i32) {
    %c0_i32 = arith.constant 0 : i32
    %c0_i32_0 = arith.constant 0 : i32
    %c0_i32_1 = arith.constant 0 : i32
    return %c0_i32, %c0_i32_0 : i32, i32
  }
  func.func @transform_6(%arg0: i32, %arg1: i32) -> (i32, i32) {
    %c0_i32 = arith.constant 0 : i32
    %c0_i32_0 = arith.constant 0 : i32
    return %arg0, %c0_i32 : i32, i32
  }
}

module attributes {stable_mosaic.version = 11 : i64} {
  func.func @_sage_layer2_kernel(%arg0: i32, %arg1: i32, %arg2: memref<128x128xbf16, #tpu.memory_space<vmem>>, %arg3: memref<128x128xbf16, #tpu.memory_space<vmem>>, %arg4: memref<128x128xbf16, #tpu.memory_space<vmem>>, %arg5: memref<128x128xbf16, #tpu.memory_space<vmem>>, %arg6: memref<128x1xf32, #tpu.memory_space<vmem>>, %arg7: memref<384x128xbf16, #tpu.memory_space<vmem>>, %arg8: memref<1x128xf32, #tpu.memory_space<vmem>>, %arg9: memref<128x128xf32, #tpu.memory_space<vmem>>, %arg10: memref<128x384xf32, #tpu.memory_space<vmem>>) attributes {dimension_semantics = [#tpu.dimension_semantics<parallel>, #tpu.dimension_semantics<arbitrary>], iteration_bounds = array<i64: 1, 1>, scalar_prefetch = 0 : i64, scratch_operands = 1 : i64, tpu.core_type = #tpu.core_type<tc>, window_params = [{transform_indices = @transform_0, window_bounds = array<i64: 128, 128>}, {pipeline_mode = #tpu.pipeline_mode<synchronous>, transform_indices = @transform_1, window_bounds = array<i64: 128, 128>}, {transform_indices = @transform_2, window_bounds = array<i64: 128, 128>}, {transform_indices = @transform_3, window_bounds = array<i64: 128, 128>}, {transform_indices = @transform_4, window_bounds = array<i64: 128, 1>}, {pipeline_mode = #tpu.pipeline_mode<synchronous>, transform_indices = @transform_5, window_bounds = array<i64: 384, 128>}, {pipeline_mode = #tpu.pipeline_mode<synchronous>, transform_indices = @transform_6, window_bounds = array<i64: 1, 128>}, {transform_indices = @transform_7, window_bounds = array<i64: 128, 128>}]} {
    %c0 = arith.constant 0 : index
    %c0_0 = arith.constant 0 : index
    %0 = vector.load %arg2[%c0, %c0_0] : memref<128x128xbf16, #tpu.memory_space<vmem>>, vector<128x128xbf16>
    %c0_1 = arith.constant 0 : index
    %c0_2 = arith.constant 0 : index
    %1 = vector.load %arg3[%c0_1, %c0_2] : memref<128x128xbf16, #tpu.memory_space<vmem>>, vector<128x128xbf16>
    %cst = arith.constant dense<0.000000e+00> : vector<128x128xf32>
    %2 = tpu.matmul %0, %1, %cst {dimension_numbers = #tpu.dot_dimension_numbers<[1], [0], [0], [1], [0, 0, 1, 1], [], []>} : vector<128x128xbf16>, vector<128x128xbf16>, vector<128x128xf32> -> vector<128x128xf32>
    %c0_i32 = arith.constant 0 : i32
    %3 = arith.cmpi eq, %arg1, %c0_i32 : i32
    %4 = arith.extui %3 : i1 to i32
    %c0_i32_3 = arith.constant 0 : i32
    %5 = arith.cmpi ne, %4, %c0_i32_3 : i32
    scf.if %5 {
      %c0_8 = arith.constant 0 : index
      %c0_9 = arith.constant 0 : index
      %12 = vector.load %arg10[%c0_8, %c0_9] : memref<128x384xf32, #tpu.memory_space<vmem>>, vector<128x128xf32>
      tpu.vector_store %arg10[%c0_8, %c0_9], %2 {strides = array<i32>} : memref<128x384xf32, #tpu.memory_space<vmem>>, vector<128x128xf32>,
      %c0_10 = arith.constant 0 : index
      %c0_11 = arith.constant 0 : index
      %13 = vector.load %arg4[%c0_10, %c0_11] : memref<128x128xbf16, #tpu.memory_space<vmem>>, vector<128x128xbf16>
      %14 = arith.extf %13 : vector<128x128xbf16> to vector<128x128xf32>
      %c0_12 = arith.constant 0 : index
      %c128 = arith.constant 128 : index
      %15 = vector.load %arg10[%c0_12, %c128] : memref<128x384xf32, #tpu.memory_space<vmem>>, vector<128x128xf32>
      tpu.vector_store %arg10[%c0_12, %c128], %14 {strides = array<i32>} : memref<128x384xf32, #tpu.memory_space<vmem>>, vector<128x128xf32>,
      %c0_13 = arith.constant 0 : index
      %c0_14 = arith.constant 0 : index
      %16 = vector.load %arg5[%c0_13, %c0_14] : memref<128x128xbf16, #tpu.memory_space<vmem>>, vector<128x128xbf16>
      %17 = arith.extf %16 : vector<128x128xbf16> to vector<128x128xf32>
      %c0_15 = arith.constant 0 : index
      %c256 = arith.constant 256 : index
      %18 = vector.load %arg10[%c0_15, %c256] : memref<128x384xf32, #tpu.memory_space<vmem>>, vector<128x128xf32>
      tpu.vector_store %arg10[%c0_15, %c256], %17 {strides = array<i32>} : memref<128x384xf32, #tpu.memory_space<vmem>>, vector<128x128xf32>,
    } else {
    }
    %c0_i32_4 = arith.constant 0 : i32
    %6 = arith.cmpi sgt, %arg1, %c0_i32_4 : i32
    %7 = arith.extui %6 : i1 to i32
    %c0_i32_5 = arith.constant 0 : i32
    %8 = arith.cmpi ne, %7, %c0_i32_5 : i32
    scf.if %8 {
      %c0_8 = arith.constant 0 : index
      %c0_9 = arith.constant 0 : index
      %12 = vector.load %arg10[%c0_8, %c0_9] : memref<128x384xf32, #tpu.memory_space<vmem>>, vector<128x128xf32>
      %13 = arith.addf %12, %2 : vector<128x128xf32>
      %c0_10 = arith.constant 0 : index
      %c0_11 = arith.constant 0 : index
      %14 = vector.load %arg10[%c0_10, %c0_11] : memref<128x384xf32, #tpu.memory_space<vmem>>, vector<128x128xf32>
      tpu.vector_store %arg10[%c0_10, %c0_11], %13 {strides = array<i32>} : memref<128x384xf32, #tpu.memory_space<vmem>>, vector<128x128xf32>,
    } else {
    }
    %c0_i32_6 = arith.constant 0 : i32
    %9 = arith.cmpi eq, %arg1, %c0_i32_6 : i32
    %10 = arith.extui %9 : i1 to i32
    %c0_i32_7 = arith.constant 0 : i32
    %11 = arith.cmpi ne, %10, %c0_i32_7 : i32
    scf.if %11 {
      %c0_8 = arith.constant 0 : index
      %c0_9 = arith.constant 0 : index
      %12 = vector.load %arg10[%c0_8, %c0_9] : memref<128x384xf32, #tpu.memory_space<vmem>>, vector<128x128xf32>
      %c0_10 = arith.constant 0 : index
      %c0_11 = arith.constant 0 : index
      %13 = vector.load %arg6[%c0_10, %c0_11] : memref<128x1xf32, #tpu.memory_space<vmem>>, vector<128x1xf32>
      %14 = vector.broadcast %13 : vector<128x1xf32> to vector<128x128xf32>
      %15 = arith.mulf %12, %14 : vector<128x128xf32>
      %c0_12 = arith.constant 0 : index
      %c0_13 = arith.constant 0 : index
      %16 = vector.load %arg10[%c0_12, %c0_13] : memref<128x384xf32, #tpu.memory_space<vmem>>, vector<128x128xf32>
      tpu.vector_store %arg10[%c0_12, %c0_13], %15 {strides = array<i32>} : memref<128x384xf32, #tpu.memory_space<vmem>>, vector<128x128xf32>,
      %c0_14 = arith.constant 0 : index
      %c0_15 = arith.constant 0 : index
      %17 = vector.load %arg10[%c0_14, %c0_15] : memref<128x384xf32, #tpu.memory_space<vmem>>, vector<128x384xf32>
      %18 = arith.truncf %17 : vector<128x384xf32> to vector<128x384xbf16>
      %c0_16 = arith.constant 0 : index
      %c0_17 = arith.constant 0 : index
      %19 = vector.load %arg7[%c0_16, %c0_17] : memref<384x128xbf16, #tpu.memory_space<vmem>>, vector<384x128xbf16>
      %cst_18 = arith.constant dense<0.000000e+00> : vector<128x128xf32>
      %20 = tpu.matmul %18, %19, %cst_18 {dimension_numbers = #tpu.dot_dimension_numbers<[1], [0], [0], [1], [0, 0, 1, 1], [], []>} : vector<128x384xbf16>, vector<384x128xbf16>, vector<128x128xf32> -> vector<128x128xf32>
      %c0_19 = arith.constant 0 : index
      %c0_20 = arith.constant 0 : index
      %21 = vector.load %arg8[%c0_19, %c0_20] : memref<1x128xf32, #tpu.memory_space<vmem>>, vector<1x128xf32>
      %22 = vector.broadcast %21 : vector<1x128xf32> to vector<128x128xf32>
      %23 = arith.addf %20, %22 : vector<128x128xf32>
      %cst_21 = arith.constant 0.000000e+00 : f32
      %24 = vector.broadcast %cst_21 : f32 to vector<128x128xf32>
      %25 = arith.maximumf %23, %24 : vector<128x128xf32>
      %c0_22 = arith.constant 0 : index
      %c0_23 = arith.constant 0 : index
      %26 = vector.load %arg9[%c0_22, %c0_23] : memref<128x128xf32, #tpu.memory_space<vmem>>, vector<128x128xf32>
      tpu.vector_store %arg9[%c0_22, %c0_23], %25 {strides = array<i32>} : memref<128x128xf32, #tpu.memory_space<vmem>>, vector<128x128xf32>,
    } else {
    }
    return
  }
  func.func @transform_0(%arg0: i32, %arg1: i32) -> (i32, i32) {
    %c0_i32 = arith.constant 0 : i32
    return %arg0, %arg1 : i32, i32
  }
  func.func @transform_1(%arg0: i32, %arg1: i32) -> (i32, i32) {
    %c0_i32 = arith.constant 0 : i32
    %c0_i32_0 = arith.constant 0 : i32
    return %arg1, %c0_i32 : i32, i32
  }
  func.func @transform_2(%arg0: i32, %arg1: i32) -> (i32, i32) {
    %c0_i32 = arith.constant 0 : i32
    %c0_i32_0 = arith.constant 0 : i32
    return %arg0, %c0_i32 : i32, i32
  }
  func.func @transform_3(%arg0: i32, %arg1: i32) -> (i32, i32) {
    %c0_i32 = arith.constant 0 : i32
    %c0_i32_0 = arith.constant 0 : i32
    return %arg0, %c0_i32 : i32, i32
  }
  func.func @transform_4(%arg0: i32, %arg1: i32) -> (i32, i32) {
    %c0_i32 = arith.constant 0 : i32
    %c0_i32_0 = arith.constant 0 : i32
    return %arg0, %c0_i32 : i32, i32
  }
  func.func @transform_5(%arg0: i32, %arg1: i32) -> (i32, i32) {
    %c0_i32 = arith.constant 0 : i32
    %c0_i32_0 = arith.constant 0 : i32
    %c0_i32_1 = arith.constant 0 : i32
    return %c0_i32, %c0_i32_0 : i32, i32
  }
  func.func @transform_6(%arg0: i32, %arg1: i32) -> (i32, i32) {
    %c0_i32 = arith.constant 0 : i32
    %c0_i32_0 = arith.constant 0 : i32
    %c0_i32_1 = arith.constant 0 : i32
    return %c0_i32, %c0_i32_0 : i32, i32
  }
  func.func @transform_7(%arg0: i32, %arg1: i32) -> (i32, i32) {
    %c0_i32 = arith.constant 0 : i32
    %c0_i32_0 = arith.constant 0 : i32
    return %arg0, %c0_i32 : i32, i32
  }
}

</mosaic_0001>

<llo_original>
// kernel: graphsage_forward.2
$region0: #{graphsage_forward.2}
  #allocation0 [shape = 'u32[]', space=smem, size = 0x4, offset = 0x4, fixed_abs, tag = 'smem constant byte address 0x4 - core index']
  #allocation1 [shape = 'u32[72,128]{1,0:T(1,128)}', space=vmem, size = 0x9000, scoped, tag = 'internal scratch']
  #allocation2 [shape = 'f32[128,256]{1,0:T(8,128)}', space=vmem, size = 0x20000, scoped, tag = 'scratch operand']
  %s0 = inlined_call_operand.vmem [shape: bf16[128,128], index: 0, kind: input, shape index: {}]
  %s1 = inlined_call_operand.vmem [shape: bf16[128,128], index: 1, kind: input, shape index: {}, may-alias: {1,2}]
  %s2 = inlined_call_operand.vmem [shape: bf16[128,128], index: 2, kind: input, shape index: {}, may-alias: {1,2}]
  %s3 = inlined_call_operand.vmem [shape: f32[128,1], index: 3, kind: input, shape index: {}]
  %s4 = inlined_call_operand.vmem [shape: bf16[256,128], index: 4, kind: input, shape index: {}]
  %s5 = inlined_call_operand.vmem [shape: f32[1,128], index: 5, kind: input, shape index: {}]
  %s6 = inlined_call_operand.vmem [shape: bf16[128,128], index: 6, kind: output, shape index: {}]
  %s7 = sld [smem:[#allocation0]]
  $region46: #{graphsage_forward.2} parent=0
    _
  %s9 = ssub.s32 1, %s7
  %s10 = scalar_select 0, %s9, %s7
  // Predicated region
  $region2: #{graphsage_forward.2} parent=0 // pred_check
    _
  $region3: #{graphsage_forward.2} parent=0 // pred_check_branch
    %12 = sbr.rel (0) target = $region5
  $region4: #{graphsage_forward.2} parent=0 // pred_region
    _
  $region5: #{graphsage_forward.2} parent=0 // pred_fallthru
    _
  // Predicated region
  $region6: #{graphsage_forward.2} parent=0 // pred_check
    _
  $region7: #{graphsage_forward.2} parent=0 // pred_check_branch
    %14 = sbr.rel (0) target = $region9
  $region8: #{graphsage_forward.2} parent=0 // pred_region
    _
  $region9: #{graphsage_forward.2} parent=0 // pred_fallthru
    _
  // Predicated region
  $region10: #{graphsage_forward.2} parent=0 // pred_check
    _
  $region11: #{graphsage_forward.2} parent=0 // pred_check_branch
    %16 = sbr.rel (0) target = $region13
  $region12: #{graphsage_forward.2} parent=0 // pred_region
    _
  $region13: #{graphsage_forward.2} parent=0 // pred_fallthru
    _
  // Predicated region
  $region14: #{graphsage_forward.2} parent=0 // pred_check
    _
  $region15: #{graphsage_forward.2} parent=0 // pred_check_branch
    %18 = sbr.rel (0) target = $region17
  $region16: #{graphsage_forward.2} parent=0 // pred_region
    _
  $region17: #{graphsage_forward.2} parent=0 // pred_fallthru
    _
  // Predicated region
  $region18: #{graphsage_forward.2} parent=0 // pred_check
    _
  $region19: #{graphsage_forward.2} parent=0 // pred_check_branch
    %20 = sbr.rel (0) target = $region21
  $region20: #{graphsage_forward.2} parent=0 // pred_region
    _
  $region21: #{graphsage_forward.2} parent=0 // pred_fallthru
    _
  // Predicated region
  $region22: #{graphsage_forward.2} parent=0 // pred_check
    _
  $region23: #{graphsage_forward.2} parent=0 // pred_check_branch
    %22 = sbr.rel (0) target = $region25
  $region24: #{graphsage_forward.2} parent=0 // pred_region
    _
  $region25: #{graphsage_forward.2} parent=0 // pred_fallthru
    _
  %v23 = vld [vmem:[%s0] sm:$0xf]
  %v24 = vld [vmem:[%s0 + $0x4] sm:$0xf]
  %v25 = vld [vmem:[%s0 + $0x8] sm:$0xf]
  %v26 = vld [vmem:[%s0 + $0xc] sm:$0xf]
  %v27 = vld [vmem:[%s0 + $0x10] sm:$0xf]
  %v28 = vld [vmem:[%s0 + $0x14] sm:$0xf]
  %v29 = vld [vmem:[%s0 + $0x18] sm:$0xf]
  %v30 = vld [vmem:[%s0 + $0x1c] sm:$0xf]
  %v31 = vld [vmem:[%s0 + $0x20] sm:$0xf]
  %v32 = vld [vmem:[%s0 + $0x24] sm:$0xf]
  %v33 = vld [vmem:[%s0 + $0x28] sm:$0xf]
  %v34 = vld [vmem:[%s0 + $0x2c] sm:$0xf]
  %v35 = vld [vmem:[%s0 + $0x30] sm:$0xf]
  %v36 = vld [vmem:[%s0 + $0x34] sm:$0xf]
  %v37 = vld [vmem:[%s0 + $0x38] sm:$0xf]
  %v38 = vld [vmem:[%s0 + $0x3c] sm:$0xf]
  %v39 = vld [vmem:[%s1] sm:$0xf]
  %v40 = vld [vmem:[%s1 + $0x4] sm:$0xf]
  %v41 = vld [vmem:[%s1 + $0x8] sm:$0xf]
  %v42 = vld [vmem:[%s1 + $0xc] sm:$0xf]
  %v43 = vld [vmem:[%s1 + $0x10] sm:$0xf]
  %v44 = vld [vmem:[%s1 + $0x14] sm:$0xf]
  %v45 = vld [vmem:[%s1 + $0x18] sm:$0xf]
  %v46 = vld [vmem:[%s1 + $0x1c] sm:$0xf]
  %v47 = vld [vmem:[%s1 + $0x20] sm:$0xf]
  %v48 = vld [vmem:[%s1 + $0x24] sm:$0xf]
  %v49 = vld [vmem:[%s1 + $0x28] sm:$0xf]
  %v50 = vld [vmem:[%s1 + $0x2c] sm:$0xf]
  %v51 = vld [vmem:[%s1 + $0x30] sm:$0xf]
  %v52 = vld [vmem:[%s1 + $0x34] sm:$0xf]
  %v53 = vld [vmem:[%s1 + $0x38] sm:$0xf]
  %v54 = vld [vmem:[%s1 + $0x3c] sm:$0xf]
  %v71 = vunpack.c.l.b16 %v23
  %v72 = vunpack.c.l.b16 %v24
  %v73 = vunpack.c.l.b16 %v25
  %v74 = vunpack.c.l.b16 %v26
  %v75 = vunpack.c.l.b16 %v27
  %v76 = vunpack.c.l.b16 %v28
  %v77 = vunpack.c.l.b16 %v29
  %v78 = vunpack.c.l.b16 %v30
  %v79 = vunpack.c.l.b16 %v31
  %v80 = vunpack.c.l.b16 %v32
  %v81 = vunpack.c.l.b16 %v33
  %v82 = vunpack.c.l.b16 %v34
  %v83 = vunpack.c.l.b16 %v35
  %v84 = vunpack.c.l.b16 %v36
  %v85 = vunpack.c.l.b16 %v37
  %v86 = vunpack.c.l.b16 %v38
  %v87 = vpack.c.b16 %v72, %v71
  %v88 = vpack.c.b16 %v74, %v73
  %v89 = vpack.c.b16 %v76, %v75
  %v90 = vpack.c.b16 %v78, %v77
  %v91 = vpack.c.b16 %v80, %v79
  %v92 = vpack.c.b16 %v82, %v81
  %v93 = vpack.c.b16 %v84, %v83
  %v94 = vpack.c.b16 %v86, %v85
  %v119 = vunpack.c.l.b16 %v39
  %v120 = vunpack.c.l.b16 %v40
  %v121 = vunpack.c.l.b16 %v41
  %v122 = vunpack.c.l.b16 %v42
  %v123 = vunpack.c.l.b16 %v43
  %v124 = vunpack.c.l.b16 %v44
  %v125 = vunpack.c.l.b16 %v45
  %v126 = vunpack.c.l.b16 %v46
  %v127 = vunpack.c.l.b16 %v47
  %v128 = vunpack.c.l.b16 %v48
  %v129 = vunpack.c.l.b16 %v49
  %v130 = vunpack.c.l.b16 %v50
  %v131 = vunpack.c.l.b16 %v51
  %v132 = vunpack.c.l.b16 %v52
  %v133 = vunpack.c.l.b16 %v53
  %v134 = vunpack.c.l.b16 %v54
  %v135 = vpack.c.b16 %v120, %v119
  %v136 = vpack.c.b16 %v122, %v121
  %v137 = vpack.c.b16 %v124, %v123
  %v138 = vpack.c.b16 %v126, %v125
  %v139 = vpack.c.b16 %v128, %v127
  %v140 = vpack.c.b16 %v130, %v129
  %v141 = vpack.c.b16 %v132, %v131
  %v142 = vpack.c.b16 %v134, %v133
  %151 = vmatpush.bf16.msra.mxu0 %v142
  %152 = vmatpush.bf16.msra.mxu0 %v141
  %153 = vmatpush.bf16.msra.mxu0 %v140
  %154 = vmatpush.bf16.msra.mxu0 %v139
  %155 = vmatpush.bf16.msra.mxu0 %v138
  %156 = vmatpush.bf16.msra.mxu0 %v137
  %157 = vmatpush.bf16.msra.mxu0 %v136
  %158 = vmatpush.bf16.msra.mxu0 %v135
  %159 = vmatmul.bf16.gmra.mxu0 %v87
  %v160 = vpop.f32.mrf.mxu0
  %v161 = vadd.f32 0.0, %v160
  %v162 = vpop.f32.mrf.mxu0
  %v163 = vadd.f32 0.0, %v162
  %164 = vmatmul.bf16.gmra.mxu0 %v88
  %v165 = vpop.f32.mrf.mxu0
  %v166 = vadd.f32 0.0, %v165
  %v167 = vpop.f32.mrf.mxu0
  %v168 = vadd.f32 0.0, %v167
  %169 = vmatmul.bf16.gmra.mxu0 %v89
  %v170 = vpop.f32.mrf.mxu0
  %v171 = vadd.f32 0.0, %v170
  %v172 = vpop.f32.mrf.mxu0
  %v173 = vadd.f32 0.0, %v172
  %174 = vmatmul.bf16.gmra.mxu0 %v90
  %v175 = vpop.f32.mrf.mxu0
  %v176 = vadd.f32 0.0, %v175
  %v177 = vpop.f32.mrf.mxu0
  %v178 = vadd.f32 0.0, %v177
  %179 = vmatmul.bf16.gmra.mxu0 %v91
  %v180 = vpop.f32.mrf.mxu0
  %v181 = vadd.f32 0.0, %v180
  %v182 = vpop.f32.mrf.mxu0
  %v183 = vadd.f32 0.0, %v182
  %184 = vmatmul.bf16.gmra.mxu0 %v92
  %v185 = vpop.f32.mrf.mxu0
  %v186 = vadd.f32 0.0, %v185
  %v187 = vpop.f32.mrf.mxu0
  %v188 = vadd.f32 0.0, %v187
  %189 = vmatmul.bf16.gmra.mxu0 %v93
  %v190 = vpop.f32.mrf.mxu0
  %v191 = vadd.f32 0.0, %v190
  %v192 = vpop.f32.mrf.mxu0
  %v193 = vadd.f32 0.0, %v192
  %194 = vmatmul.bf16.gmra.mxu0 %v94
  %v195 = vpop.f32.mrf.mxu0
  %v196 = vadd.f32 0.0, %v195
  %v197 = vpop.f32.mrf.mxu0
  %v198 = vadd.f32 0.0, %v197
  %199 = vdwg.mxu0
  %p200 = scmp.eq.s32.totalorder 0, 0
  // Predicated region
  $region26: #{graphsage_forward.2} parent=0 // pred_check
    %p201 = pneg %p200
  $region27: #{graphsage_forward.2} parent=0 // pred_check_branch
    %203 = sbr.rel (%p201) target = $region29
  $region28: #{graphsage_forward.2} parent=0 // pred_region
    %204 = vst [vmem:[#allocation2] sm:$0xff] %v161
    %205 = vst [vmem:[#allocation2 + $0x10] sm:$0xff] %v163
    %206 = vst [vmem:[#allocation2 + $0x20] sm:$0xff] %v166
    %207 = vst [vmem:[#allocation2 + $0x30] sm:$0xff] %v168
    %208 = vst [vmem:[#allocation2 + $0x40] sm:$0xff] %v171
    %209 = vst [vmem:[#allocation2 + $0x50] sm:$0xff] %v173
    %210 = vst [vmem:[#allocation2 + $0x60] sm:$0xff] %v176
    %211 = vst [vmem:[#allocation2 + $0x70] sm:$0xff] %v178
    %212 = vst [vmem:[#allocation2 + $0x80] sm:$0xff] %v181
    %213 = vst [vmem:[#allocation2 + $0x90] sm:$0xff] %v183
    %214 = vst [vmem:[#allocation2 + $0xa0] sm:$0xff] %v186
    %215 = vst [vmem:[#allocation2 + $0xb0] sm:$0xff] %v188
    %216 = vst [vmem:[#allocation2 + $0xc0] sm:$0xff] %v191
    %217 = vst [vmem:[#allocation2 + $0xd0] sm:$0xff] %v193
    %218 = vst [vmem:[#allocation2 + $0xe0] sm:$0xff] %v196
    %219 = vst [vmem:[#allocation2 + $0xf0] sm:$0xff] %v198
    %v220 = vld [vmem:[%s2] sm:$0xf]
    %v221 = vld [vmem:[%s2 + $0x4] sm:$0xf]
    %v222 = vld [vmem:[%s2 + $0x8] sm:$0xf]
    %v223 = vld [vmem:[%s2 + $0xc] sm:$0xf]
    %v224 = vld [vmem:[%s2 + $0x10] sm:$0xf]
    %v225 = vld [vmem:[%s2 + $0x14] sm:$0xf]
    %v226 = vld [vmem:[%s2 + $0x18] sm:$0xf]
    %v227 = vld [vmem:[%s2 + $0x1c] sm:$0xf]
    %v228 = vld [vmem:[%s2 + $0x20] sm:$0xf]
    %v229 = vld [vmem:[%s2 + $0x24] sm:$0xf]
    %v230 = vld [vmem:[%s2 + $0x28] sm:$0xf]
    %v231 = vld [vmem:[%s2 + $0x2c] sm:$0xf]
    %v232 = vld [vmem:[%s2 + $0x30] sm:$0xf]
    %v233 = vld [vmem:[%s2 + $0x34] sm:$0xf]
    %v234 = vld [vmem:[%s2 + $0x38] sm:$0xf]
    %v235 = vld [vmem:[%s2 + $0x3c] sm:$0xf]
    %v236 = vunpack.c.l.bf16 %v220
    %v237 = vunpack.c.l.bf16 %v221
    %v238 = vunpack.c.l.bf16 %v222
    %v239 = vunpack.c.l.bf16 %v223
    %v240 = vunpack.c.l.bf16 %v224
    %v241 = vunpack.c.l.bf16 %v225
    %v242 = vunpack.c.l.bf16 %v226
    %v243 = vunpack.c.l.bf16 %v227
    %v244 = vunpack.c.l.bf16 %v228
    %v245 = vunpack.c.l.bf16 %v229
    %v246 = vunpack.c.l.bf16 %v230
    %v247 = vunpack.c.l.bf16 %v231
    %v248 = vunpack.c.l.bf16 %v232
    %v249 = vunpack.c.l.bf16 %v233
    %v250 = vunpack.c.l.bf16 %v234
    %v251 = vunpack.c.l.bf16 %v235
    %252 = vst [vmem:[#allocation2 + $0x8] sm:$0xff] %v236
    %253 = vst [vmem:[#allocation2 + $0x18] sm:$0xff] %v237
    %254 = vst [vmem:[#allocation2 + $0x28] sm:$0xff] %v238
    %255 = vst [vmem:[#allocation2 + $0x38] sm:$0xff] %v239
    %256 = vst [vmem:[#allocation2 + $0x48] sm:$0xff] %v240
    %257 = vst [vmem:[#allocation2 + $0x58] sm:$0xff] %v241
    %258 = vst [vmem:[#allocation2 + $0x68] sm:$0xff] %v242
    %259 = vst [vmem:[#allocation2 + $0x78] sm:$0xff] %v243
    %260 = vst [vmem:[#allocation2 + $0x88] sm:$0xff] %v244
    %261 = vst [vmem:[#allocation2 + $0x98] sm:$0xff] %v245
    %262 = vst [vmem:[#allocation2 + $0xa8] sm:$0xff] %v246
    %263 = vst [vmem:[#allocation2 + $0xb8] sm:$0xff] %v247
    %264 = vst [vmem:[#allocation2 + $0xc8] sm:$0xff] %v248
    %265 = vst [vmem:[#allocation2 + $0xd8] sm:$0xff] %v249
    %266 = vst [vmem:[#allocation2 + $0xe8] sm:$0xff] %v250
    %267 = vst [vmem:[#allocation2 + $0xf8] sm:$0xff] %v251
  $region29: #{graphsage_forward.2} parent=0 // pred_fallthru
    _
  %p268 = scmp.gt.s32.totalorder 0, 0
  // Predicated region
  $region30: #{graphsage_forward.2} parent=0 // pred_check
    %p269 = pneg %p268
  $region31: #{graphsage_forward.2} parent=0 // pred_check_branch
    %271 = sbr.rel (%p269) target = $region33
  $region32: #{graphsage_forward.2} parent=0 // pred_region
    %v272 = vld [vmem:[#allocation2] sm:$0xff]
    %v273 = vld [vmem:[#allocation2 + $0x10] sm:$0xff]
    %v274 = vld [vmem:[#allocation2 + $0x20] sm:$0xff]
    %v275 = vld [vmem:[#allocation2 + $0x30] sm:$0xff]
    %v276 = vld [vmem:[#allocation2 + $0x40] sm:$0xff]
    %v277 = vld [vmem:[#allocation2 + $0x50] sm:$0xff]
    %v278 = vld [vmem:[#allocation2 + $0x60] sm:$0xff]
    %v279 = vld [vmem:[#allocation2 + $0x70] sm:$0xff]
    %v280 = vld [vmem:[#allocation2 + $0x80] sm:$0xff]
    %v281 = vld [vmem:[#allocation2 + $0x90] sm:$0xff]
    %v282 = vld [vmem:[#allocation2 + $0xa0] sm:$0xff]
    %v283 = vld [vmem:[#allocation2 + $0xb0] sm:$0xff]
    %v284 = vld [vmem:[#allocation2 + $0xc0] sm:$0xff]
    %v285 = vld [vmem:[#allocation2 + $0xd0] sm:$0xff]
    %v286 = vld [vmem:[#allocation2 + $0xe0] sm:$0xff]
    %v287 = vld [vmem:[#allocation2 + $0xf0] sm:$0xff]
    %v288 = vadd.f32 %v272, %v161
    %v289 = vadd.f32 %v273, %v163
    %v290 = vadd.f32 %v274, %v166
    %v291 = vadd.f32 %v275, %v168
    %v292 = vadd.f32 %v276, %v171
    %v293 = vadd.f32 %v277, %v173
    %v294 = vadd.f32 %v278, %v176
    %v295 = vadd.f32 %v279, %v178
    %v296 = vadd.f32 %v280, %v181
    %v297 = vadd.f32 %v281, %v183
    %v298 = vadd.f32 %v282, %v186
    %v299 = vadd.f32 %v283, %v188
    %v300 = vadd.f32 %v284, %v191
    %v301 = vadd.f32 %v285, %v193
    %v302 = vadd.f32 %v286, %v196
    %v303 = vadd.f32 %v287, %v198
    %304 = vst [vmem:[#allocation2] sm:$0xff] %v288
    %305 = vst [vmem:[#allocation2 + $0x10] sm:$0xff] %v289
    %306 = vst [vmem:[#allocation2 + $0x20] sm:$0xff] %v290
    %307 = vst [vmem:[#allocation2 + $0x30] sm:$0xff] %v291
    %308 = vst [vmem:[#allocation2 + $0x40] sm:$0xff] %v292
    %309 = vst [vmem:[#allocation2 + $0x50] sm:$0xff] %v293
    %310 = vst [vmem:[#allocation2 + $0x60] sm:$0xff] %v294
    %311 = vst [vmem:[#allocation2 + $0x70] sm:$0xff] %v295
    %312 = vst [vmem:[#allocation2 + $0x80] sm:$0xff] %v296
    %313 = vst [vmem:[#allocation2 + $0x90] sm:$0xff] %v297
    %314 = vst [vmem:[#allocation2 + $0xa0] sm:$0xff] %v298
    %315 = vst [vmem:[#allocation2 + $0xb0] sm:$0xff] %v299
    %316 = vst [vmem:[#allocation2 + $0xc0] sm:$0xff] %v300
    %317 = vst [vmem:[#allocation2 + $0xd0] sm:$0xff] %v301
    %318 = vst [vmem:[#allocation2 + $0xe0] sm:$0xff] %v302
    %319 = vst [vmem:[#allocation2 + $0xf0] sm:$0xff] %v303
  $region33: #{graphsage_forward.2} parent=0 // pred_fallthru
    _
  // Predicated region
  $region34: #{graphsage_forward.2} parent=0 // pred_check
    %p320 = pneg %p200
  $region35: #{graphsage_forward.2} parent=0 // pred_check_branch
    %322 = sbr.rel (%p320) target = $region37
  $region36: #{graphsage_forward.2} parent=0 // pred_region
    %v323 = vld [vmem:[#allocation2] sm:$0xff]
    %v324 = vld [vmem:[#allocation2 + $0x10] sm:$0xff]
    %v325 = vld [vmem:[#allocation2 + $0x20] sm:$0xff]
    %v326 = vld [vmem:[#allocation2 + $0x30] sm:$0xff]
    %v327 = vld [vmem:[#allocation2 + $0x40] sm:$0xff]
    %v328 = vld [vmem:[#allocation2 + $0x50] sm:$0xff]
    %v329 = vld [vmem:[#allocation2 + $0x60] sm:$0xff]
    %v330 = vld [vmem:[#allocation2 + $0x70] sm:$0xff]
    %v331 = vld [vmem:[#allocation2 + $0x80] sm:$0xff]
    %v332 = vld [vmem:[#allocation2 + $0x90] sm:$0xff]
    %v333 = vld [vmem:[#allocation2 + $0xa0] sm:$0xff]
    %v334 = vld [vmem:[#allocation2 + $0xb0] sm:$0xff]
    %v335 = vld [vmem:[#allocation2 + $0xc0] sm:$0xff]
    %v336 = vld [vmem:[#allocation2 + $0xd0] sm:$0xff]
    %v337 = vld [vmem:[#allocation2 + $0xe0] sm:$0xff]
    %v338 = vld [vmem:[#allocation2 + $0xf0] sm:$0xff]
    %v339 = vld [vmem:[%s3] sm:$0xff]
    %v340 = vld [vmem:[%s3 + $0x8] sm:$0xff]
    %v341 = vld [vmem:[%s3 + $0x10] sm:$0xff]
    %v342 = vld [vmem:[%s3 + $0x18] sm:$0xff]
    %v343 = vld [vmem:[%s3 + $0x20] sm:$0xff]
    %v344 = vld [vmem:[%s3 + $0x28] sm:$0xff]
    %v345 = vld [vmem:[%s3 + $0x30] sm:$0xff]
    %v346 = vld [vmem:[%s3 + $0x38] sm:$0xff]
    %v347 = vld [vmem:[%s3 + $0x40] sm:$0xff]
    %v348 = vld [vmem:[%s3 + $0x48] sm:$0xff]
    %v349 = vld [vmem:[%s3 + $0x50] sm:$0xff]
    %v350 = vld [vmem:[%s3 + $0x58] sm:$0xff]
    %v351 = vld [vmem:[%s3 + $0x60] sm:$0xff]
    %v352 = vld [vmem:[%s3 + $0x68] sm:$0xff]
    %v353 = vld [vmem:[%s3 + $0x70] sm:$0xff]
    %v354 = vld [vmem:[%s3 + $0x78] sm:$0xff]
    %356 = vset.pattern.permute.xlu0 0
    %357 = vperm.xlu0 %356, %v339
    %v358 = vpop.permute.xlu0 %357
    %361 = vset.pattern.permute.xlu0 0
    %362 = vperm.xlu0 %361, %v340
    %v363 = vpop.permute.xlu0 %362
    %366 = vset.pattern.permute.xlu0 0
    %367 = vperm.xlu0 %366, %v341
    %v368 = vpop.permute.xlu0 %367
    %371 = vset.pattern.permute.xlu0 0
    %372 = vperm.xlu0 %371, %v342
    %v373 = vpop.permute.xlu0 %372
    %376 = vset.pattern.permute.xlu0 0
    %377 = vperm.xlu0 %376, %v343
    %v378 = vpop.permute.xlu0 %377
    %381 = vset.pattern.permute.xlu0 0
    %382 = vperm.xlu0 %381, %v344
    %v383 = vpop.permute.xlu0 %382
    %386 = vset.pattern.permute.xlu0 0
    %387 = vperm.xlu0 %386, %v345
    %v388 = vpop.permute.xlu0 %387
    %391 = vset.pattern.permute.xlu0 0
    %392 = vperm.xlu0 %391, %v346
    %v393 = vpop.permute.xlu0 %392
    %396 = vset.pattern.permute.xlu0 0
    %397 = vperm.xlu0 %396, %v347
    %v398 = vpop.permute.xlu0 %397
    %401 = vset.pattern.permute.xlu0 0
    %402 = vperm.xlu0 %401, %v348
    %v403 = vpop.permute.xlu0 %402
    %406 = vset.pattern.permute.xlu0 0
    %407 = vperm.xlu0 %406, %v349
    %v408 = vpop.permute.xlu0 %407
    %411 = vset.pattern.permute.xlu0 0
    %412 = vperm.xlu0 %411, %v350
    %v413 = vpop.permute.xlu0 %412
    %416 = vset.pattern.permute.xlu0 0
    %417 = vperm.xlu0 %416, %v351
    %v418 = vpop.permute.xlu0 %417
    %421 = vset.pattern.permute.xlu0 0
    %422 = vperm.xlu0 %421, %v352
    %v423 = vpop.permute.xlu0 %422
    %426 = vset.pattern.permute.xlu0 0
    %427 = vperm.xlu0 %426, %v353
    %v428 = vpop.permute.xlu0 %427
    %431 = vset.pattern.permute.xlu0 0
    %432 = vperm.xlu0 %431, %v354
    %v433 = vpop.permute.xlu0 %432
    %v435 = vmul.f32 %v323, %v358
    %v436 = vmul.f32 %v324, %v363
    %v437 = vmul.f32 %v325, %v368
    %v438 = vmul.f32 %v326, %v373
    %v439 = vmul.f32 %v327, %v378
    %v440 = vmul.f32 %v328, %v383
    %v441 = vmul.f32 %v329, %v388
    %v442 = vmul.f32 %v330, %v393
    %v443 = vmul.f32 %v331, %v398
    %v444 = vmul.f32 %v332, %v403
    %v445 = vmul.f32 %v333, %v408
    %v446 = vmul.f32 %v334, %v413
    %v447 = vmul.f32 %v335, %v418
    %v448 = vmul.f32 %v336, %v423
    %v449 = vmul.f32 %v337, %v428
    %v450 = vmul.f32 %v338, %v433
    %451 = vst [vmem:[#allocation2] sm:$0xff] %v435
    %452 = vst [vmem:[#allocation2 + $0x10] sm:$0xff] %v436
    %453 = vst [vmem:[#allocation2 + $0x20] sm:$0xff] %v437
    %454 = vst [vmem:[#allocation2 + $0x30] sm:$0xff] %v438
    %455 = vst [vmem:[#allocation2 + $0x40] sm:$0xff] %v439
    %456 = vst [vmem:[#allocation2 + $0x50] sm:$0xff] %v440
    %457 = vst [vmem:[#allocation2 + $0x60] sm:$0xff] %v441
    %458 = vst [vmem:[#allocation2 + $0x70] sm:$0xff] %v442
    %459 = vst [vmem:[#allocation2 + $0x80] sm:$0xff] %v443
    %460 = vst [vmem:[#allocation2 + $0x90] sm:$0xff] %v444
    %461 = vst [vmem:[#allocation2 + $0xa0] sm:$0xff] %v445
    %462 = vst [vmem:[#allocation2 + $0xb0] sm:$0xff] %v446
    %463 = vst [vmem:[#allocation2 + $0xc0] sm:$0xff] %v447
    %464 = vst [vmem:[#allocation2 + $0xd0] sm:$0xff] %v448
    %465 = vst [vmem:[#allocation2 + $0xe0] sm:$0xff] %v449
    %466 = vst [vmem:[#allocation2 + $0xf0] sm:$0xff] %v450
    %v467 = vld [vmem:[#allocation2] sm:$0xff]
    %v468 = vld [vmem:[#allocation2 + $0x8] sm:$0xff]
    %v469 = vld [vmem:[#allocation2 + $0x10] sm:$0xff]
    %v470 = vld [vmem:[#allocation2 + $0x18] sm:$0xff]
    %v471 = vld [vmem:[#allocation2 + $0x20] sm:$0xff]
    %v472 = vld [vmem:[#allocation2 + $0x28] sm:$0xff]
    %v473 = vld [vmem:[#allocation2 + $0x30] sm:$0xff]
    %v474 = vld [vmem:[#allocation2 + $0x38] sm:$0xff]
    %v475 = vld [vmem:[#allocation2 + $0x40] sm:$0xff]
    %v476 = vld [vmem:[#allocation2 + $0x48] sm:$0xff]
    %v477 = vld [vmem:[#allocation2 + $0x50] sm:$0xff]
    %v478 = vld [vmem:[#allocation2 + $0x58] sm:$0xff]
    %v479 = vld [vmem:[#allocation2 + $0x60] sm:$0xff]
    %v480 = vld [vmem:[#allocation2 + $0x68] sm:$0xff]
    %v481 = vld [vmem:[#allocation2 + $0x70] sm:$0xff]
    %v482 = vld [vmem:[#allocation2 + $0x78] sm:$0xff]
    %v483 = vld [vmem:[#allocation2 + $0x80] sm:$0xff]
    %v484 = vld [vmem:[#allocation2 + $0x88] sm:$0xff]
    %v485 = vld [vmem:[#allocation2 + $0x90] sm:$0xff]
    %v486 = vld [vmem:[#allocation2 + $0x98] sm:$0xff]
    %v487 = vld [vmem:[#allocation2 + $0xa0] sm:$0xff]
    %v488 = vld [vmem:[#allocation2 + $0xa8] sm:$0xff]
    %v489 = vld [vmem:[#allocation2 + $0xb0] sm:$0xff]
    %v490 = vld [vmem:[#allocation2 + $0xb8] sm:$0xff]
    %v491 = vld [vmem:[#allocation2 + $0xc0] sm:$0xff]
    %v492 = vld [vmem:[#allocation2 + $0xc8] sm:$0xff]
    %v493 = vld [vmem:[#allocation2 + $0xd0] sm:$0xff]
    %v494 = vld [vmem:[#allocation2 + $0xd8] sm:$0xff]
    %v495 = vld [vmem:[#allocation2 + $0xe0] sm:$0xff]
    %v496 = vld [vmem:[#allocation2 + $0xe8] sm:$0xff]
    %v497 = vld [vmem:[#allocation2 + $0xf0] sm:$0xff]
    %v498 = vld [vmem:[#allocation2 + $0xf8] sm:$0xff]
    %v499 = vpack.c.bf16 %v469, %v467
    %v500 = vpack.c.bf16 %v470, %v468
    %v501 = vpack.c.bf16 %v473, %v471
    %v502 = vpack.c.bf16 %v474, %v472
    %v503 = vpack.c.bf16 %v477, %v475
    %v504 = vpack.c.bf16 %v478, %v476
    %v505 = vpack.c.bf16 %v481, %v479
    %v506 = vpack.c.bf16 %v482, %v480
    %v507 = vpack.c.bf16 %v485, %v483
    %v508 = vpack.c.bf16 %v486, %v484
    %v509 = vpack.c.bf16 %v489, %v487
    %v510 = vpack.c.bf16 %v490, %v488
    %v511 = vpack.c.bf16 %v493, %v491
    %v512 = vpack.c.bf16 %v494, %v492
    %v513 = vpack.c.bf16 %v497, %v495
    %v514 = vpack.c.bf16 %v498, %v496
    %v515 = vld [vmem:[%s4] sm:$0xf]
    %v516 = vld [vmem:[%s4 + $0x4] sm:$0xf]
    %v517 = vld [vmem:[%s4 + $0x8] sm:$0xf]
    %v518 = vld [vmem:[%s4 + $0xc] sm:$0xf]
    %v519 = vld [vmem:[%s4 + $0x10] sm:$0xf]
    %v520 = vld [vmem:[%s4 + $0x14] sm:$0xf]
    %v521 = vld [vmem:[%s4 + $0x18] sm:$0xf]
    %v522 = vld [vmem:[%s4 + $0x1c] sm:$0xf]
    %v523 = vld [vmem:[%s4 + $0x20] sm:$0xf]
    %v524 = vld [vmem:[%s4 + $0x24] sm:$0xf]
    %v525 = vld [vmem:[%s4 + $0x28] sm:$0xf]
    %v526 = vld [vmem:[%s4 + $0x2c] sm:$0xf]
    %v527 = vld [vmem:[%s4 + $0x30] sm:$0xf]
    %v528 = vld [vmem:[%s4 + $0x34] sm:$0xf]
    %v529 = vld [vmem:[%s4 + $0x38] sm:$0xf]
    %v530 = vld [vmem:[%s4 + $0x3c] sm:$0xf]
    %v531 = vld [vmem:[%s4 + $0x40] sm:$0xf]
    %v532 = vld [vmem:[%s4 + $0x44] sm:$0xf]
    %v533 = vld [vmem:[%s4 + $0x48] sm:$0xf]
    %v534 = vld [vmem:[%s4 + $0x4c] sm:$0xf]
    %v535 = vld [vmem:[%s4 + $0x50] sm:$0xf]
    %v536 = vld [vmem:[%s4 + $0x54] sm:$0xf]
    %v537 = vld [vmem:[%s4 + $0x58] sm:$0xf]
    %v538 = vld [vmem:[%s4 + $0x5c] sm:$0xf]
    %v539 = vld [vmem:[%s4 + $0x60] sm:$0xf]
    %v540 = vld [vmem:[%s4 + $0x64] sm:$0xf]
    %v541 = vld [vmem:[%s4 + $0x68] sm:$0xf]
    %v542 = vld [vmem:[%s4 + $0x6c] sm:$0xf]
    %v543 = vld [vmem:[%s4 + $0x70] sm:$0xf]
    %v544 = vld [vmem:[%s4 + $0x74] sm:$0xf]
    %v545 = vld [vmem:[%s4 + $0x78] sm:$0xf]
    %v546 = vld [vmem:[%s4 + $0x7c] sm:$0xf]
    %v547 = vld [vmem:[%s5] sm:$0x1]
    %v549 = vperm.slane %v547, 0
    %v583 = vunpack.c.l.b16 %v515
    %v584 = vunpack.c.l.b16 %v516
    %v585 = vunpack.c.l.b16 %v517
    %v586 = vunpack.c.l.b16 %v518
    %v587 = vunpack.c.l.b16 %v519
    %v588 = vunpack.c.l.b16 %v520
    %v589 = vunpack.c.l.b16 %v521
    %v590 = vunpack.c.l.b16 %v522
    %v591 = vunpack.c.l.b16 %v523
    %v592 = vunpack.c.l.b16 %v524
    %v593 = vunpack.c.l.b16 %v525
    %v594 = vunpack.c.l.b16 %v526
    %v595 = vunpack.c.l.b16 %v527
    %v596 = vunpack.c.l.b16 %v528
    %v597 = vunpack.c.l.b16 %v529
    %v598 = vunpack.c.l.b16 %v530
    %v599 = vunpack.c.l.b16 %v531
    %v600 = vunpack.c.l.b16 %v532
    %v601 = vunpack.c.l.b16 %v533
    %v602 = vunpack.c.l.b16 %v534
    %v603 = vunpack.c.l.b16 %v535
    %v604 = vunpack.c.l.b16 %v536
    %v605 = vunpack.c.l.b16 %v537
    %v606 = vunpack.c.l.b16 %v538
    %v607 = vunpack.c.l.b16 %v539
    %v608 = vunpack.c.l.b16 %v540
    %v609 = vunpack.c.l.b16 %v541
    %v610 = vunpack.c.l.b16 %v542
    %v611 = vunpack.c.l.b16 %v543
    %v612 = vunpack.c.l.b16 %v544
    %v613 = vunpack.c.l.b16 %v545
    %v614 = vunpack.c.l.b16 %v546
    %v615 = vpack.c.b16 %v584, %v583
    %v616 = vpack.c.b16 %v586, %v585
    %v617 = vpack.c.b16 %v588, %v587
    %v618 = vpack.c.b16 %v590, %v589
    %v619 = vpack.c.b16 %v592, %v591
    %v620 = vpack.c.b16 %v594, %v593
    %v621 = vpack.c.b16 %v596, %v595
    %v622 = vpack.c.b16 %v598, %v597
    %v623 = vpack.c.b16 %v600, %v599
    %v624 = vpack.c.b16 %v602, %v601
    %v625 = vpack.c.b16 %v604, %v603
    %v626 = vpack.c.b16 %v606, %v605
    %v627 = vpack.c.b16 %v608, %v607
    %v628 = vpack.c.b16 %v610, %v609
    %v629 = vpack.c.b16 %v612, %v611
    %v630 = vpack.c.b16 %v614, %v613
    %647 = vmatpush.bf16.msra.mxu0 %v622
    %648 = vmatpush.bf16.msra.mxu0 %v621
    %649 = vmatpush.bf16.msra.mxu0 %v620
    %650 = vmatpush.bf16.msra.mxu0 %v619
    %651 = vmatpush.bf16.msra.mxu0 %v618
    %652 = vmatpush.bf16.msra.mxu0 %v617
    %653 = vmatpush.bf16.msra.mxu0 %v616
    %654 = vmatpush.bf16.msra.mxu0 %v615
    %655 = vmatmul.bf16.gmra.mxu0 %v499
    %v656 = vpop.f32.mrf.mxu0
    %v657 = vadd.f32 %v549, %v656
    %v658 = vpop.f32.mrf.mxu0
    %v659 = vadd.f32 %v549, %v658
    %660 = vmatmul.bf16.gmra.mxu0 %v501
    %v661 = vpop.f32.mrf.mxu0
    %v662 = vadd.f32 %v549, %v661
    %v663 = vpop.f32.mrf.mxu0
    %v664 = vadd.f32 %v549, %v663
    %665 = vmatmul.bf16.gmra.mxu0 %v503
    %v666 = vpop.f32.mrf.mxu0
    %v667 = vadd.f32 %v549, %v666
    %v668 = vpop.f32.mrf.mxu0
    %v669 = vadd.f32 %v549, %v668
    %670 = vmatmul.bf16.gmra.mxu0 %v505
    %v671 = vpop.f32.mrf.mxu0
    %v672 = vadd.f32 %v549, %v671
    %v673 = vpop.f32.mrf.mxu0
    %v674 = vadd.f32 %v549, %v673
    %675 = vmatmul.bf16.gmra.mxu0 %v507
    %v676 = vpop.f32.mrf.mxu0
    %v677 = vadd.f32 %v549, %v676
    %v678 = vpop.f32.mrf.mxu0
    %v679 = vadd.f32 %v549, %v678
    %680 = vmatmul.bf16.gmra.mxu0 %v509
    %v681 = vpop.f32.mrf.mxu0
    %v682 = vadd.f32 %v549, %v681
    %v683 = vpop.f32.mrf.mxu0
    %v684 = vadd.f32 %v549, %v683
    %685 = vmatmul.bf16.gmra.mxu0 %v511
    %v686 = vpop.f32.mrf.mxu0
    %v687 = vadd.f32 %v549, %v686
    %v688 = vpop.f32.mrf.mxu0
    %v689 = vadd.f32 %v549, %v688
    %690 = vmatmul.bf16.gmra.mxu0 %v513
    %v691 = vpop.f32.mrf.mxu0
    %v692 = vadd.f32 %v549, %v691
    %v693 = vpop.f32.mrf.mxu0
    %v694 = vadd.f32 %v549, %v693
    %695 = vdwg.mxu0
    %696 = vmatpush.bf16.msra.mxu0 %v630
    %697 = vmatpush.bf16.msra.mxu0 %v629
    %698 = vmatpush.bf16.msra.mxu0 %v628
    %699 = vmatpush.bf16.msra.mxu0 %v627
    %700 = vmatpush.bf16.msra.mxu0 %v626
    %701 = vmatpush.bf16.msra.mxu0 %v625
    %702 = vmatpush.bf16.msra.mxu0 %v624
    %703 = vmatpush.bf16.msra.mxu0 %v623
    %704 = vmatmul.bf16.gmra.mxu0 %v500
    %v705 = vpop.f32.mrf.mxu0
    %v706 = vadd.f32 %v657, %v705
    %v707 = vpop.f32.mrf.mxu0
    %v708 = vadd.f32 %v659, %v707
    %709 = vmatmul.bf16.gmra.mxu0 %v502
    %v710 = vpop.f32.mrf.mxu0
    %v711 = vadd.f32 %v662, %v710
    %v712 = vpop.f32.mrf.mxu0
    %v713 = vadd.f32 %v664, %v712
    %714 = vmatmul.bf16.gmra.mxu0 %v504
    %v715 = vpop.f32.mrf.mxu0
    %v716 = vadd.f32 %v667, %v715
    %v717 = vpop.f32.mrf.mxu0
    %v718 = vadd.f32 %v669, %v717
    %719 = vmatmul.bf16.gmra.mxu0 %v506
    %v720 = vpop.f32.mrf.mxu0
    %v721 = vadd.f32 %v672, %v720
    %v722 = vpop.f32.mrf.mxu0
    %v723 = vadd.f32 %v674, %v722
    %724 = vmatmul.bf16.gmra.mxu0 %v508
    %v725 = vpop.f32.mrf.mxu0
    %v726 = vadd.f32 %v677, %v725
    %v727 = vpop.f32.mrf.mxu0
    %v728 = vadd.f32 %v679, %v727
    %729 = vmatmul.bf16.gmra.mxu0 %v510
    %v730 = vpop.f32.mrf.mxu0
    %v731 = vadd.f32 %v682, %v730
    %v732 = vpop.f32.mrf.mxu0
    %v733 = vadd.f32 %v684, %v732
    %734 = vmatmul.bf16.gmra.mxu0 %v512
    %v735 = vpop.f32.mrf.mxu0
    %v736 = vadd.f32 %v687, %v735
    %v737 = vpop.f32.mrf.mxu0
    %v738 = vadd.f32 %v689, %v737
    %739 = vmatmul.bf16.gmra.mxu0 %v514
    %v740 = vpop.f32.mrf.mxu0
    %v741 = vadd.f32 %v692, %v740
    %v742 = vpop.f32.mrf.mxu0
    %v743 = vadd.f32 %v694, %v742
    %744 = vdwg.mxu0
    %v745 = vmax.f32 %v706, 0.0
    %v746 = vmax.f32 %v708, 0.0
    %v747 = vmax.f32 %v711, 0.0
    %v748 = vmax.f32 %v713, 0.0
    %v749 = vmax.f32 %v716, 0.0
    %v750 = vmax.f32 %v718, 0.0
    %v751 = vmax.f32 %v721, 0.0
    %v752 = vmax.f32 %v723, 0.0
    %v753 = vmax.f32 %v726, 0.0
    %v754 = vmax.f32 %v728, 0.0
    %v755 = vmax.f32 %v731, 0.0
    %v756 = vmax.f32 %v733, 0.0
    %v757 = vmax.f32 %v736, 0.0
    %v758 = vmax.f32 %v738, 0.0
    %v759 = vmax.f32 %v741, 0.0
    %v760 = vmax.f32 %v743, 0.0
    %v761 = vpack.c.bf16 %v745, %v745
    %v762 = vpack.c.bf16 %v746, %v746
    %v763 = vpack.c.bf16 %v747, %v747
    %v764 = vpack.c.bf16 %v748, %v748
    %v765 = vpack.c.bf16 %v749, %v749
    %v766 = vpack.c.bf16 %v750, %v750
    %v767 = vpack.c.bf16 %v751, %v751
    %v768 = vpack.c.bf16 %v752, %v752
    %v769 = vpack.c.bf16 %v753, %v753
    %v770 = vpack.c.bf16 %v754, %v754
    %v771 = vpack.c.bf16 %v755, %v755
    %v772 = vpack.c.bf16 %v756, %v756
    %v773 = vpack.c.bf16 %v757, %v757
    %v774 = vpack.c.bf16 %v758, %v758
    %v775 = vpack.c.bf16 %v759, %v759
    %v776 = vpack.c.bf16 %v760, %v760
    %777 = vst [vmem:[%s6] sm:$0xf] %v761
    %778 = vst [vmem:[%s6 + $0x4] sm:$0xf] %v762
    %779 = vst [vmem:[%s6 + $0x8] sm:$0xf] %v763
    %780 = vst [vmem:[%s6 + $0xc] sm:$0xf] %v764
    %781 = vst [vmem:[%s6 + $0x10] sm:$0xf] %v765
    %782 = vst [vmem:[%s6 + $0x14] sm:$0xf] %v766
    %783 = vst [vmem:[%s6 + $0x18] sm:$0xf] %v767
    %784 = vst [vmem:[%s6 + $0x1c] sm:$0xf] %v768
    %785 = vst [vmem:[%s6 + $0x20] sm:$0xf] %v769
    %786 = vst [vmem:[%s6 + $0x24] sm:$0xf] %v770
    %787 = vst [vmem:[%s6 + $0x28] sm:$0xf] %v771
    %788 = vst [vmem:[%s6 + $0x2c] sm:$0xf] %v772
    %789 = vst [vmem:[%s6 + $0x30] sm:$0xf] %v773
    %790 = vst [vmem:[%s6 + $0x34] sm:$0xf] %v774
    %791 = vst [vmem:[%s6 + $0x38] sm:$0xf] %v775
    %792 = vst [vmem:[%s6 + $0x3c] sm:$0xf] %v776
  $region37: #{graphsage_forward.2} parent=0 // pred_fallthru
    _
  // Predicated region
  $region38: #{graphsage_forward.2} parent=0 // pred_check
    _
  $region39: #{graphsage_forward.2} parent=0 // pred_check_branch
    %794 = sbr.rel (0) target = $region41
  $region40: #{graphsage_forward.2} parent=0 // pred_region
    _
  $region41: #{graphsage_forward.2} parent=0 // pred_fallthru
    _
  // Predicated region
  $region42: #{graphsage_forward.2} parent=0 // pred_check
    _
  $region43: #{graphsage_forward.2} parent=0 // pred_check_branch
    %796 = sbr.rel (0) target = $region45
  $region44: #{graphsage_forward.2} parent=0 // pred_region
    _
  $region45: #{graphsage_forward.2} parent=0 // pred_fallthru
    _

// kernel: graphsage_forward.3
$region0: #{graphsage_forward.3}
  #allocation0 [shape = 'u32[]', space=smem, size = 0x4, offset = 0x4, fixed_abs, tag = 'smem constant byte address 0x4 - core index']
  #allocation1 [shape = 'u32[72,128]{1,0:T(1,128)}', space=vmem, size = 0x9000, scoped, tag = 'internal scratch']
  #allocation2 [shape = 'f32[128,384]{1,0:T(8,128)}', space=vmem, size = 0x30000, scoped, tag = 'scratch operand']
  %s0 = inlined_call_operand.vmem [shape: bf16[128,128], index: 0, kind: input, shape index: {}]
  %s1 = inlined_call_operand.vmem [shape: bf16[128,128], index: 1, kind: input, shape index: {}, may-alias: {1,2}]
  %s2 = inlined_call_operand.vmem [shape: bf16[128,128], index: 2, kind: input, shape index: {}, may-alias: {1,2}]
  %s3 = inlined_call_operand.vmem [shape: bf16[128,128], index: 3, kind: input, shape index: {}]
  %s4 = inlined_call_operand.vmem [shape: f32[128,1], index: 4, kind: input, shape index: {}]
  %s5 = inlined_call_operand.vmem [shape: bf16[384,128], index: 5, kind: input, shape index: {}]
  %s6 = inlined_call_operand.vmem [shape: f32[1,128], index: 6, kind: input, shape index: {}]
  %s7 = inlined_call_operand.vmem [shape: f32[128,128], index: 7, kind: output, shape index: {}]
  %s8 = sld [smem:[#allocation0]]
  $region50: #{graphsage_forward.3} parent=0
    _
  %s10 = ssub.s32 1, %s8
  %s11 = scalar_select 0, %s10, %s8
  // Predicated region
  $region2: #{graphsage_forward.3} parent=0 // pred_check
    _
  $region3: #{graphsage_forward.3} parent=0 // pred_check_branch
    %13 = sbr.rel (0) target = $region5
  $region4: #{graphsage_forward.3} parent=0 // pred_region
    _
  $region5: #{graphsage_forward.3} parent=0 // pred_fallthru
    _
  // Predicated region
  $region6: #{graphsage_forward.3} parent=0 // pred_check
    _
  $region7: #{graphsage_forward.3} parent=0 // pred_check_branch
    %15 = sbr.rel (0) target = $region9
  $region8: #{graphsage_forward.3} parent=0 // pred_region
    _
  $region9: #{graphsage_forward.3} parent=0 // pred_fallthru
    _
  // Predicated region
  $region10: #{graphsage_forward.3} parent=0 // pred_check
    _
  $region11: #{graphsage_forward.3} parent=0 // pred_check_branch
    %17 = sbr.rel (0) target = $region13
  $region12: #{graphsage_forward.3} parent=0 // pred_region
    _
  $region13: #{graphsage_forward.3} parent=0 // pred_fallthru
    _
  // Predicated region
  $region14: #{graphsage_forward.3} parent=0 // pred_check
    _
  $region15: #{graphsage_forward.3} parent=0 // pred_check_branch
    %19 = sbr.rel (0) target = $region17
  $region16: #{graphsage_forward.3} parent=0 // pred_region
    _
  $region17: #{graphsage_forward.3} parent=0 // pred_fallthru
    _
  // Predicated region
  $region18: #{graphsage_forward.3} parent=0 // pred_check
    _
  $region19: #{graphsage_forward.3} parent=0 // pred_check_branch
    %21 = sbr.rel (0) target = $region21
  $region20: #{graphsage_forward.3} parent=0 // pred_region
    _
  $region21: #{graphsage_forward.3} parent=0 // pred_fallthru
    _
  // Predicated region
  $region22: #{graphsage_forward.3} parent=0 // pred_check
    _
  $region23: #{graphsage_forward.3} parent=0 // pred_check_branch
    %23 = sbr.rel (0) target = $region25
  $region24: #{graphsage_forward.3} parent=0 // pred_region
    _
  $region25: #{graphsage_forward.3} parent=0 // pred_fallthru
    _
  // Predicated region
  $region26: #{graphsage_forward.3} parent=0 // pred_check
    _
  $region27: #{graphsage_forward.3} parent=0 // pred_check_branch
    %25 = sbr.rel (0) target = $region29
  $region28: #{graphsage_forward.3} parent=0 // pred_region
    _
  $region29: #{graphsage_forward.3} parent=0 // pred_fallthru
    _
  %v26 = vld [vmem:[%s0] sm:$0xf]
  %v27 = vld [vmem:[%s0 + $0x4] sm:$0xf]
  %v28 = vld [vmem:[%s0 + $0x8] sm:$0xf]
  %v29 = vld [vmem:[%s0 + $0xc] sm:$0xf]
  %v30 = vld [vmem:[%s0 + $0x10] sm:$0xf]
  %v31 = vld [vmem:[%s0 + $0x14] sm:$0xf]
  %v32 = vld [vmem:[%s0 + $0x18] sm:$0xf]
  %v33 = vld [vmem:[%s0 + $0x1c] sm:$0xf]
  %v34 = vld [vmem:[%s0 + $0x20] sm:$0xf]
  %v35 = vld [vmem:[%s0 + $0x24] sm:$0xf]
  %v36 = vld [vmem:[%s0 + $0x28] sm:$0xf]
  %v37 = vld [vmem:[%s0 + $0x2c] sm:$0xf]
  %v38 = vld [vmem:[%s0 + $0x30] sm:$0xf]
  %v39 = vld [vmem:[%s0 + $0x34] sm:$0xf]
  %v40 = vld [vmem:[%s0 + $0x38] sm:$0xf]
  %v41 = vld [vmem:[%s0 + $0x3c] sm:$0xf]
  %v42 = vld [vmem:[%s1] sm:$0xf]
  %v43 = vld [vmem:[%s1 + $0x4] sm:$0xf]
  %v44 = vld [vmem:[%s1 + $0x8] sm:$0xf]
  %v45 = vld [vmem:[%s1 + $0xc] sm:$0xf]
  %v46 = vld [vmem:[%s1 + $0x10] sm:$0xf]
  %v47 = vld [vmem:[%s1 + $0x14] sm:$0xf]
  %v48 = vld [vmem:[%s1 + $0x18] sm:$0xf]
  %v49 = vld [vmem:[%s1 + $0x1c] sm:$0xf]
  %v50 = vld [vmem:[%s1 + $0x20] sm:$0xf]
  %v51 = vld [vmem:[%s1 + $0x24] sm:$0xf]
  %v52 = vld [vmem:[%s1 + $0x28] sm:$0xf]
  %v53 = vld [vmem:[%s1 + $0x2c] sm:$0xf]
  %v54 = vld [vmem:[%s1 + $0x30] sm:$0xf]
  %v55 = vld [vmem:[%s1 + $0x34] sm:$0xf]
  %v56 = vld [vmem:[%s1 + $0x38] sm:$0xf]
  %v57 = vld [vmem:[%s1 + $0x3c] sm:$0xf]
  %v74 = vunpack.c.l.b16 %v26
  %v75 = vunpack.c.l.b16 %v27
  %v76 = vunpack.c.l.b16 %v28
  %v77 = vunpack.c.l.b16 %v29
  %v78 = vunpack.c.l.b16 %v30
  %v79 = vunpack.c.l.b16 %v31
  %v80 = vunpack.c.l.b16 %v32
  %v81 = vunpack.c.l.b16 %v33
  %v82 = vunpack.c.l.b16 %v34
  %v83 = vunpack.c.l.b16 %v35
  %v84 = vunpack.c.l.b16 %v36
  %v85 = vunpack.c.l.b16 %v37
  %v86 = vunpack.c.l.b16 %v38
  %v87 = vunpack.c.l.b16 %v39
  %v88 = vunpack.c.l.b16 %v40
  %v89 = vunpack.c.l.b16 %v41
  %v90 = vpack.c.b16 %v75, %v74
  %v91 = vpack.c.b16 %v77, %v76
  %v92 = vpack.c.b16 %v79, %v78
  %v93 = vpack.c.b16 %v81, %v80
  %v94 = vpack.c.b16 %v83, %v82
  %v95 = vpack.c.b16 %v85, %v84
  %v96 = vpack.c.b16 %v87, %v86
  %v97 = vpack.c.b16 %v89, %v88
  %v122 = vunpack.c.l.b16 %v42
  %v123 = vunpack.c.l.b16 %v43
  %v124 = vunpack.c.l.b16 %v44
  %v125 = vunpack.c.l.b16 %v45
  %v126 = vunpack.c.l.b16 %v46
  %v127 = vunpack.c.l.b16 %v47
  %v128 = vunpack.c.l.b16 %v48
  %v129 = vunpack.c.l.b16 %v49
  %v130 = vunpack.c.l.b16 %v50
  %v131 = vunpack.c.l.b16 %v51
  %v132 = vunpack.c.l.b16 %v52
  %v133 = vunpack.c.l.b16 %v53
  %v134 = vunpack.c.l.b16 %v54
  %v135 = vunpack.c.l.b16 %v55
  %v136 = vunpack.c.l.b16 %v56
  %v137 = vunpack.c.l.b16 %v57
  %v138 = vpack.c.b16 %v123, %v122
  %v139 = vpack.c.b16 %v125, %v124
  %v140 = vpack.c.b16 %v127, %v126
  %v141 = vpack.c.b16 %v129, %v128
  %v142 = vpack.c.b16 %v131, %v130
  %v143 = vpack.c.b16 %v133, %v132
  %v144 = vpack.c.b16 %v135, %v134
  %v145 = vpack.c.b16 %v137, %v136
  %154 = vmatpush.bf16.msra.mxu0 %v145
  %155 = vmatpush.bf16.msra.mxu0 %v144
  %156 = vmatpush.bf16.msra.mxu0 %v143
  %157 = vmatpush.bf16.msra.mxu0 %v142
  %158 = vmatpush.bf16.msra.mxu0 %v141
  %159 = vmatpush.bf16.msra.mxu0 %v140
  %160 = vmatpush.bf16.msra.mxu0 %v139
  %161 = vmatpush.bf16.msra.mxu0 %v138
  %162 = vmatmul.bf16.gmra.mxu0 %v90
  %v163 = vpop.f32.mrf.mxu0
  %v164 = vadd.f32 0.0, %v163
  %v165 = vpop.f32.mrf.mxu0
  %v166 = vadd.f32 0.0, %v165
  %167 = vmatmul.bf16.gmra.mxu0 %v91
  %v168 = vpop.f32.mrf.mxu0
  %v169 = vadd.f32 0.0, %v168
  %v170 = vpop.f32.mrf.mxu0
  %v171 = vadd.f32 0.0, %v170
  %172 = vmatmul.bf16.gmra.mxu0 %v92
  %v173 = vpop.f32.mrf.mxu0
  %v174 = vadd.f32 0.0, %v173
  %v175 = vpop.f32.mrf.mxu0
  %v176 = vadd.f32 0.0, %v175
  %177 = vmatmul.bf16.gmra.mxu0 %v93
  %v178 = vpop.f32.mrf.mxu0
  %v179 = vadd.f32 0.0, %v178
  %v180 = vpop.f32.mrf.mxu0
  %v181 = vadd.f32 0.0, %v180
  %182 = vmatmul.bf16.gmra.mxu0 %v94
  %v183 = vpop.f32.mrf.mxu0
  %v184 = vadd.f32 0.0, %v183
  %v185 = vpop.f32.mrf.mxu0
  %v186 = vadd.f32 0.0, %v185
  %187 = vmatmul.bf16.gmra.mxu0 %v95
  %v188 = vpop.f32.mrf.mxu0
  %v189 = vadd.f32 0.0, %v188
  %v190 = vpop.f32.mrf.mxu0
  %v191 = vadd.f32 0.0, %v190
  %192 = vmatmul.bf16.gmra.mxu0 %v96
  %v193 = vpop.f32.mrf.mxu0
  %v194 = vadd.f32 0.0, %v193
  %v195 = vpop.f32.mrf.mxu0
  %v196 = vadd.f32 0.0, %v195
  %197 = vmatmul.bf16.gmra.mxu0 %v97
  %v198 = vpop.f32.mrf.mxu0
  %v199 = vadd.f32 0.0, %v198
  %v200 = vpop.f32.mrf.mxu0
  %v201 = vadd.f32 0.0, %v200
  %202 = vdwg.mxu0
  %p203 = scmp.eq.s32.totalorder 0, 0
  // Predicated region
  $region30: #{graphsage_forward.3} parent=0 // pred_check
    %p204 = pneg %p203
  $region31: #{graphsage_forward.3} parent=0 // pred_check_branch
    %206 = sbr.rel (%p204) target = $region33
  $region32: #{graphsage_forward.3} parent=0 // pred_region
    %207 = vst [vmem:[#allocation2] sm:$0xff] %v164
    %208 = vst [vmem:[#allocation2 + $0x18] sm:$0xff] %v166
    %209 = vst [vmem:[#allocation2 + $0x30] sm:$0xff] %v169
    %210 = vst [vmem:[#allocation2 + $0x48] sm:$0xff] %v171
    %211 = vst [vmem:[#allocation2 + $0x60] sm:$0xff] %v174
    %212 = vst [vmem:[#allocation2 + $0x78] sm:$0xff] %v176
    %213 = vst [vmem:[#allocation2 + $0x90] sm:$0xff] %v179
    %214 = vst [vmem:[#allocation2 + $0xa8] sm:$0xff] %v181
    %215 = vst [vmem:[#allocation2 + $0xc0] sm:$0xff] %v184
    %216 = vst [vmem:[#allocation2 + $0xd8] sm:$0xff] %v186
    %217 = vst [vmem:[#allocation2 + $0xf0] sm:$0xff] %v189
    %218 = vst [vmem:[#allocation2 + $0x108] sm:$0xff] %v191
    %219 = vst [vmem:[#allocation2 + $0x120] sm:$0xff] %v194
    %220 = vst [vmem:[#allocation2 + $0x138] sm:$0xff] %v196
    %221 = vst [vmem:[#allocation2 + $0x150] sm:$0xff] %v199
    %222 = vst [vmem:[#allocation2 + $0x168] sm:$0xff] %v201
    %v223 = vld [vmem:[%s2] sm:$0xf]
    %v224 = vld [vmem:[%s2 + $0x4] sm:$0xf]
    %v225 = vld [vmem:[%s2 + $0x8] sm:$0xf]
    %v226 = vld [vmem:[%s2 + $0xc] sm:$0xf]
    %v227 = vld [vmem:[%s2 + $0x10] sm:$0xf]
    %v228 = vld [vmem:[%s2 + $0x14] sm:$0xf]
    %v229 = vld [vmem:[%s2 + $0x18] sm:$0xf]
    %v230 = vld [vmem:[%s2 + $0x1c] sm:$0xf]
    %v231 = vld [vmem:[%s2 + $0x20] sm:$0xf]
    %v232 = vld [vmem:[%s2 + $0x24] sm:$0xf]
    %v233 = vld [vmem:[%s2 + $0x28] sm:$0xf]
    %v234 = vld [vmem:[%s2 + $0x2c] sm:$0xf]
    %v235 = vld [vmem:[%s2 + $0x30] sm:$0xf]
    %v236 = vld [vmem:[%s2 + $0x34] sm:$0xf]
    %v237 = vld [vmem:[%s2 + $0x38] sm:$0xf]
    %v238 = vld [vmem:[%s2 + $0x3c] sm:$0xf]
    %v239 = vunpack.c.l.bf16 %v223
    %v240 = vunpack.c.l.bf16 %v224
    %v241 = vunpack.c.l.bf16 %v225
    %v242 = vunpack.c.l.bf16 %v226
    %v243 = vunpack.c.l.bf16 %v227
    %v244 = vunpack.c.l.bf16 %v228
    %v245 = vunpack.c.l.bf16 %v229
    %v246 = vunpack.c.l.bf16 %v230
    %v247 = vunpack.c.l.bf16 %v231
    %v248 = vunpack.c.l.bf16 %v232
    %v249 = vunpack.c.l.bf16 %v233
    %v250 = vunpack.c.l.bf16 %v234
    %v251 = vunpack.c.l.bf16 %v235
    %v252 = vunpack.c.l.bf16 %v236
    %v253 = vunpack.c.l.bf16 %v237
    %v254 = vunpack.c.l.bf16 %v238
    %255 = vst [vmem:[#allocation2 + $0x8] sm:$0xff] %v239
    %256 = vst [vmem:[#allocation2 + $0x20] sm:$0xff] %v240
    %257 = vst [vmem:[#allocation2 + $0x38] sm:$0xff] %v241
    %258 = vst [vmem:[#allocation2 + $0x50] sm:$0xff] %v242
    %259 = vst [vmem:[#allocation2 + $0x68] sm:$0xff] %v243
    %260 = vst [vmem:[#allocation2 + $0x80] sm:$0xff] %v244
    %261 = vst [vmem:[#allocation2 + $0x98] sm:$0xff] %v245
    %262 = vst [vmem:[#allocation2 + $0xb0] sm:$0xff] %v246
    %263 = vst [vmem:[#allocation2 + $0xc8] sm:$0xff] %v247
    %264 = vst [vmem:[#allocation2 + $0xe0] sm:$0xff] %v248
    %265 = vst [vmem:[#allocation2 + $0xf8] sm:$0xff] %v249
    %266 = vst [vmem:[#allocation2 + $0x110] sm:$0xff] %v250
    %267 = vst [vmem:[#allocation2 + $0x128] sm:$0xff] %v251
    %268 = vst [vmem:[#allocation2 + $0x140] sm:$0xff] %v252
    %269 = vst [vmem:[#allocation2 + $0x158] sm:$0xff] %v253
    %270 = vst [vmem:[#allocation2 + $0x170] sm:$0xff] %v254
    %v271 = vld [vmem:[%s3] sm:$0xf]
    %v272 = vld [vmem:[%s3 + $0x4] sm:$0xf]
    %v273 = vld [vmem:[%s3 + $0x8] sm:$0xf]
    %v274 = vld [vmem:[%s3 + $0xc] sm:$0xf]
    %v275 = vld [vmem:[%s3 + $0x10] sm:$0xf]
    %v276 = vld [vmem:[%s3 + $0x14] sm:$0xf]
    %v277 = vld [vmem:[%s3 + $0x18] sm:$0xf]
    %v278 = vld [vmem:[%s3 + $0x1c] sm:$0xf]
    %v279 = vld [vmem:[%s3 + $0x20] sm:$0xf]
    %v280 = vld [vmem:[%s3 + $0x24] sm:$0xf]
    %v281 = vld [vmem:[%s3 + $0x28] sm:$0xf]
    %v282 = vld [vmem:[%s3 + $0x2c] sm:$0xf]
    %v283 = vld [vmem:[%s3 + $0x30] sm:$0xf]
    %v284 = vld [vmem:[%s3 + $0x34] sm:$0xf]
    %v285 = vld [vmem:[%s3 + $0x38] sm:$0xf]
    %v286 = vld [vmem:[%s3 + $0x3c] sm:$0xf]
    %v287 = vunpack.c.l.bf16 %v271
    %v288 = vunpack.c.l.bf16 %v272
    %v289 = vunpack.c.l.bf16 %v273
    %v290 = vunpack.c.l.bf16 %v274
    %v291 = vunpack.c.l.bf16 %v275
    %v292 = vunpack.c.l.bf16 %v276
    %v293 = vunpack.c.l.bf16 %v277
    %v294 = vunpack.c.l.bf16 %v278
    %v295 = vunpack.c.l.bf16 %v279
    %v296 = vunpack.c.l.bf16 %v280
    %v297 = vunpack.c.l.bf16 %v281
    %v298 = vunpack.c.l.bf16 %v282
    %v299 = vunpack.c.l.bf16 %v283
    %v300 = vunpack.c.l.bf16 %v284
    %v301 = vunpack.c.l.bf16 %v285
    %v302 = vunpack.c.l.bf16 %v286
    %303 = vst [vmem:[#allocation2 + $0x10] sm:$0xff] %v287
    %304 = vst [vmem:[#allocation2 + $0x28] sm:$0xff] %v288
    %305 = vst [vmem:[#allocation2 + $0x40] sm:$0xff] %v289
    %306 = vst [vmem:[#allocation2 + $0x58] sm:$0xff] %v290
    %307 = vst [vmem:[#allocation2 + $0x70] sm:$0xff] %v291
    %308 = vst [vmem:[#allocation2 + $0x88] sm:$0xff] %v292
    %309 = vst [vmem:[#allocation2 + $0xa0] sm:$0xff] %v293
    %310 = vst [vmem:[#allocation2 + $0xb8] sm:$0xff] %v294
    %311 = vst [vmem:[#allocation2 + $0xd0] sm:$0xff] %v295
    %312 = vst [vmem:[#allocation2 + $0xe8] sm:$0xff] %v296
    %313 = vst [vmem:[#allocation2 + $0x100] sm:$0xff] %v297
    %314 = vst [vmem:[#allocation2 + $0x118] sm:$0xff] %v298
    %315 = vst [vmem:[#allocation2 + $0x130] sm:$0xff] %v299
    %316 = vst [vmem:[#allocation2 + $0x148] sm:$0xff] %v300
    %317 = vst [vmem:[#allocation2 + $0x160] sm:$0xff] %v301
    %318 = vst [vmem:[#allocation2 + $0x178] sm:$0xff] %v302
  $region33: #{graphsage_forward.3} parent=0 // pred_fallthru
    _
  %p319 = scmp.gt.s32.totalorder 0, 0
  // Predicated region
  $region34: #{graphsage_forward.3} parent=0 // pred_check
    %p320 = pneg %p319
  $region35: #{graphsage_forward.3} parent=0 // pred_check_branch
    %322 = sbr.rel (%p320) target = $region37
  $region36: #{graphsage_forward.3} parent=0 // pred_region
    %v323 = vld [vmem:[#allocation2] sm:$0xff]
    %v324 = vld [vmem:[#allocation2 + $0x18] sm:$0xff]
    %v325 = vld [vmem:[#allocation2 + $0x30] sm:$0xff]
    %v326 = vld [vmem:[#allocation2 + $0x48] sm:$0xff]
    %v327 = vld [vmem:[#allocation2 + $0x60] sm:$0xff]
    %v328 = vld [vmem:[#allocation2 + $0x78] sm:$0xff]
    %v329 = vld [vmem:[#allocation2 + $0x90] sm:$0xff]
    %v330 = vld [vmem:[#allocation2 + $0xa8] sm:$0xff]
    %v331 = vld [vmem:[#allocation2 + $0xc0] sm:$0xff]
    %v332 = vld [vmem:[#allocation2 + $0xd8] sm:$0xff]
    %v333 = vld [vmem:[#allocation2 + $0xf0] sm:$0xff]
    %v334 = vld [vmem:[#allocation2 + $0x108] sm:$0xff]
    %v335 = vld [vmem:[#allocation2 + $0x120] sm:$0xff]
    %v336 = vld [vmem:[#allocation2 + $0x138] sm:$0xff]
    %v337 = vld [vmem:[#allocation2 + $0x150] sm:$0xff]
    %v338 = vld [vmem:[#allocation2 + $0x168] sm:$0xff]
    %v339 = vadd.f32 %v323, %v164
    %v340 = vadd.f32 %v324, %v166
    %v341 = vadd.f32 %v325, %v169
    %v342 = vadd.f32 %v326, %v171
    %v343 = vadd.f32 %v327, %v174
    %v344 = vadd.f32 %v328, %v176
    %v345 = vadd.f32 %v329, %v179
    %v346 = vadd.f32 %v330, %v181
    %v347 = vadd.f32 %v331, %v184
    %v348 = vadd.f32 %v332, %v186
    %v349 = vadd.f32 %v333, %v189
    %v350 = vadd.f32 %v334, %v191
    %v351 = vadd.f32 %v335, %v194
    %v352 = vadd.f32 %v336, %v196
    %v353 = vadd.f32 %v337, %v199
    %v354 = vadd.f32 %v338, %v201
    %355 = vst [vmem:[#allocation2] sm:$0xff] %v339
    %356 = vst [vmem:[#allocation2 + $0x18] sm:$0xff] %v340
    %357 = vst [vmem:[#allocation2 + $0x30] sm:$0xff] %v341
    %358 = vst [vmem:[#allocation2 + $0x48] sm:$0xff] %v342
    %359 = vst [vmem:[#allocation2 + $0x60] sm:$0xff] %v343
    %360 = vst [vmem:[#allocation2 + $0x78] sm:$0xff] %v344
    %361 = vst [vmem:[#allocation2 + $0x90] sm:$0xff] %v345
    %362 = vst [vmem:[#allocation2 + $0xa8] sm:$0xff] %v346
    %363 = vst [vmem:[#allocation2 + $0xc0] sm:$0xff] %v347
    %364 = vst [vmem:[#allocation2 + $0xd8] sm:$0xff] %v348
    %365 = vst [vmem:[#allocation2 + $0xf0] sm:$0xff] %v349
    %366 = vst [vmem:[#allocation2 + $0x108] sm:$0xff] %v350
    %367 = vst [vmem:[#allocation2 + $0x120] sm:$0xff] %v351
    %368 = vst [vmem:[#allocation2 + $0x138] sm:$0xff] %v352
    %369 = vst [vmem:[#allocation2 + $0x150] sm:$0xff] %v353
    %370 = vst [vmem:[#allocation2 + $0x168] sm:$0xff] %v354
  $region37: #{graphsage_forward.3} parent=0 // pred_fallthru
    _
  // Predicated region
  $region38: #{graphsage_forward.3} parent=0 // pred_check
    %p371 = pneg %p203
  $region39: #{graphsage_forward.3} parent=0 // pred_check_branch
    %373 = sbr.rel (%p371) target = $region41
  $region40: #{graphsage_forward.3} parent=0 // pred_region
    %v374 = vld [vmem:[#allocation2] sm:$0xff]
    %v375 = vld [vmem:[#allocation2 + $0x18] sm:$0xff]
    %v376 = vld [vmem:[#allocation2 + $0x30] sm:$0xff]
    %v377 = vld [vmem:[#allocation2 + $0x48] sm:$0xff]
    %v378 = vld [vmem:[#allocation2 + $0x60] sm:$0xff]
    %v379 = vld [vmem:[#allocation2 + $0x78] sm:$0xff]
    %v380 = vld [vmem:[#allocation2 + $0x90] sm:$0xff]
    %v381 = vld [vmem:[#allocation2 + $0xa8] sm:$0xff]
    %v382 = vld [vmem:[#allocation2 + $0xc0] sm:$0xff]
    %v383 = vld [vmem:[#allocation2 + $0xd8] sm:$0xff]
    %v384 = vld [vmem:[#allocation2 + $0xf0] sm:$0xff]
    %v385 = vld [vmem:[#allocation2 + $0x108] sm:$0xff]
    %v386 = vld [vmem:[#allocation2 + $0x120] sm:$0xff]
    %v387 = vld [vmem:[#allocation2 + $0x138] sm:$0xff]
    %v388 = vld [vmem:[#allocation2 + $0x150] sm:$0xff]
    %v389 = vld [vmem:[#allocation2 + $0x168] sm:$0xff]
    %v390 = vld [vmem:[%s4] sm:$0xff]
    %v391 = vld [vmem:[%s4 + $0x8] sm:$0xff]
    %v392 = vld [vmem:[%s4 + $0x10] sm:$0xff]
    %v393 = vld [vmem:[%s4 + $0x18] sm:$0xff]
    %v394 = vld [vmem:[%s4 + $0x20] sm:$0xff]
    %v395 = vld [vmem:[%s4 + $0x28] sm:$0xff]
    %v396 = vld [vmem:[%s4 + $0x30] sm:$0xff]
    %v397 = vld [vmem:[%s4 + $0x38] sm:$0xff]
    %v398 = vld [vmem:[%s4 + $0x40] sm:$0xff]
    %v399 = vld [vmem:[%s4 + $0x48] sm:$0xff]
    %v400 = vld [vmem:[%s4 + $0x50] sm:$0xff]
    %v401 = vld [vmem:[%s4 + $0x58] sm:$0xff]
    %v402 = vld [vmem:[%s4 + $0x60] sm:$0xff]
    %v403 = vld [vmem:[%s4 + $0x68] sm:$0xff]
    %v404 = vld [vmem:[%s4 + $0x70] sm:$0xff]
    %v405 = vld [vmem:[%s4 + $0x78] sm:$0xff]
    %407 = vset.pattern.permute.xlu0 0
    %408 = vperm.xlu0 %407, %v390
    %v409 = vpop.permute.xlu0 %408
    %412 = vset.pattern.permute.xlu0 0
    %413 = vperm.xlu0 %412, %v391
    %v414 = vpop.permute.xlu0 %413
    %417 = vset.pattern.permute.xlu0 0
    %418 = vperm.xlu0 %417, %v392
    %v419 = vpop.permute.xlu0 %418
    %422 = vset.pattern.permute.xlu0 0
    %423 = vperm.xlu0 %422, %v393
    %v424 = vpop.permute.xlu0 %423
    %427 = vset.pattern.permute.xlu0 0
    %428 = vperm.xlu0 %427, %v394
    %v429 = vpop.permute.xlu0 %428
    %432 = vset.pattern.permute.xlu0 0
    %433 = vperm.xlu0 %432, %v395
    %v434 = vpop.permute.xlu0 %433
    %437 = vset.pattern.permute.xlu0 0
    %438 = vperm.xlu0 %437, %v396
    %v439 = vpop.permute.xlu0 %438
    %442 = vset.pattern.permute.xlu0 0
    %443 = vperm.xlu0 %442, %v397
    %v444 = vpop.permute.xlu0 %443
    %447 = vset.pattern.permute.xlu0 0
    %448 = vperm.xlu0 %447, %v398
    %v449 = vpop.permute.xlu0 %448
    %452 = vset.pattern.permute.xlu0 0
    %453 = vperm.xlu0 %452, %v399
    %v454 = vpop.permute.xlu0 %453
    %457 = vset.pattern.permute.xlu0 0
    %458 = vperm.xlu0 %457, %v400
    %v459 = vpop.permute.xlu0 %458
    %462 = vset.pattern.permute.xlu0 0
    %463 = vperm.xlu0 %462, %v401
    %v464 = vpop.permute.xlu0 %463
    %467 = vset.pattern.permute.xlu0 0
    %468 = vperm.xlu0 %467, %v402
    %v469 = vpop.permute.xlu0 %468
    %472 = vset.pattern.permute.xlu0 0
    %473 = vperm.xlu0 %472, %v403
    %v474 = vpop.permute.xlu0 %473
    %477 = vset.pattern.permute.xlu0 0
    %478 = vperm.xlu0 %477, %v404
    %v479 = vpop.permute.xlu0 %478
    %482 = vset.pattern.permute.xlu0 0
    %483 = vperm.xlu0 %482, %v405
    %v484 = vpop.permute.xlu0 %483
    %v486 = vmul.f32 %v374, %v409
    %v487 = vmul.f32 %v375, %v414
    %v488 = vmul.f32 %v376, %v419
    %v489 = vmul.f32 %v377, %v424
    %v490 = vmul.f32 %v378, %v429
    %v491 = vmul.f32 %v379, %v434
    %v492 = vmul.f32 %v380, %v439
    %v493 = vmul.f32 %v381, %v444
    %v494 = vmul.f32 %v382, %v449
    %v495 = vmul.f32 %v383, %v454
    %v496 = vmul.f32 %v384, %v459
    %v497 = vmul.f32 %v385, %v464
    %v498 = vmul.f32 %v386, %v469
    %v499 = vmul.f32 %v387, %v474
    %v500 = vmul.f32 %v388, %v479
    %v501 = vmul.f32 %v389, %v484
    %502 = vst [vmem:[#allocation2] sm:$0xff] %v486
    %503 = vst [vmem:[#allocation2 + $0x18] sm:$0xff] %v487
    %504 = vst [vmem:[#allocation2 + $0x30] sm:$0xff] %v488
    %505 = vst [vmem:[#allocation2 + $0x48] sm:$0xff] %v489
    %506 = vst [vmem:[#allocation2 + $0x60] sm:$0xff] %v490
    %507 = vst [vmem:[#allocation2 + $0x78] sm:$0xff] %v491
    %508 = vst [vmem:[#allocation2 + $0x90] sm:$0xff] %v492
    %509 = vst [vmem:[#allocation2 + $0xa8] sm:$0xff] %v493
    %510 = vst [vmem:[#allocation2 + $0xc0] sm:$0xff] %v494
    %511 = vst [vmem:[#allocation2 + $0xd8] sm:$0xff] %v495
    %512 = vst [vmem:[#allocation2 + $0xf0] sm:$0xff] %v496
    %513 = vst [vmem:[#allocation2 + $0x108] sm:$0xff] %v497
    %514 = vst [vmem:[#allocation2 + $0x120] sm:$0xff] %v498
    %515 = vst [vmem:[#allocation2 + $0x138] sm:$0xff] %v499
    %516 = vst [vmem:[#allocation2 + $0x150] sm:$0xff] %v500
    %517 = vst [vmem:[#allocation2 + $0x168] sm:$0xff] %v501
    %v518 = vld [vmem:[#allocation2] sm:$0xff]
    %v519 = vld [vmem:[#allocation2 + $0x8] sm:$0xff]
    %v520 = vld [vmem:[#allocation2 + $0x10] sm:$0xff]
    %v521 = vld [vmem:[#allocation2 + $0x18] sm:$0xff]
    %v522 = vld [vmem:[#allocation2 + $0x20] sm:$0xff]
    %v523 = vld [vmem:[#allocation2 + $0x28] sm:$0xff]
    %v524 = vld [vmem:[#allocation2 + $0x30] sm:$0xff]
    %v525 = vld [vmem:[#allocation2 + $0x38] sm:$0xff]
    %v526 = vld [vmem:[#allocation2 + $0x40] sm:$0xff]
    %v527 = vld [vmem:[#allocation2 + $0x48] sm:$0xff]
    %v528 = vld [vmem:[#allocation2 + $0x50] sm:$0xff]
    %v529 = vld [vmem:[#allocation2 + $0x58] sm:$0xff]
    %v530 = vld [vmem:[#allocation2 + $0x60] sm:$0xff]
    %v531 = vld [vmem:[#allocation2 + $0x68] sm:$0xff]
    %v532 = vld [vmem:[#allocation2 + $0x70] sm:$0xff]
    %v533 = vld [vmem:[#allocation2 + $0x78] sm:$0xff]
    %v534 = vld [vmem:[#allocation2 + $0x80] sm:$0xff]
    %v535 = vld [vmem:[#allocation2 + $0x88] sm:$0xff]
    %v536 = vld [vmem:[#allocation2 + $0x90] sm:$0xff]
    %v537 = vld [vmem:[#allocation2 + $0x98] sm:$0xff]
    %v538 = vld [vmem:[#allocation2 + $0xa0] sm:$0xff]
    %v539 = vld [vmem:[#allocation2 + $0xa8] sm:$0xff]
    %v540 = vld [vmem:[#allocation2 + $0xb0] sm:$0xff]
    %v541 = vld [vmem:[#allocation2 + $0xb8] sm:$0xff]
    %v542 = vld [vmem:[#allocation2 + $0xc0] sm:$0xff]
    %v543 = vld [vmem:[#allocation2 + $0xc8] sm:$0xff]
    %v544 = vld [vmem:[#allocation2 + $0xd0] sm:$0xff]
    %v545 = vld [vmem:[#allocation2 + $0xd8] sm:$0xff]
    %v546 = vld [vmem:[#allocation2 + $0xe0] sm:$0xff]
    %v547 = vld [vmem:[#allocation2 + $0xe8] sm:$0xff]
    %v548 = vld [vmem:[#allocation2 + $0xf0] sm:$0xff]
    %v549 = vld [vmem:[#allocation2 + $0xf8] sm:$0xff]
    %v550 = vld [vmem:[#allocation2 + $0x100] sm:$0xff]
    %v551 = vld [vmem:[#allocation2 + $0x108] sm:$0xff]
    %v552 = vld [vmem:[#allocation2 + $0x110] sm:$0xff]
    %v553 = vld [vmem:[#allocation2 + $0x118] sm:$0xff]
    %v554 = vld [vmem:[#allocation2 + $0x120] sm:$0xff]
    %v555 = vld [vmem:[#allocation2 + $0x128] sm:$0xff]
    %v556 = vld [vmem:[#allocation2 + $0x130] sm:$0xff]
    %v557 = vld [vmem:[#allocation2 + $0x138] sm:$0xff]
    %v558 = vld [vmem:[#allocation2 + $0x140] sm:$0xff]
    %v559 = vld [vmem:[#allocation2 + $0x148] sm:$0xff]
    %v560 = vld [vmem:[#allocation2 + $0x150] sm:$0xff]
    %v561 = vld [vmem:[#allocation2 + $0x158] sm:$0xff]
    %v562 = vld [vmem:[#allocation2 + $0x160] sm:$0xff]
    %v563 = vld [vmem:[#allocation2 + $0x168] sm:$0xff]
    %v564 = vld [vmem:[#allocation2 + $0x170] sm:$0xff]
    %v565 = vld [vmem:[#allocation2 + $0x178] sm:$0xff]
    %v566 = vpack.c.bf16 %v521, %v518
    %v567 = vpack.c.bf16 %v522, %v519
    %v568 = vpack.c.bf16 %v523, %v520
    %v569 = vpack.c.bf16 %v527, %v524
    %v570 = vpack.c.bf16 %v528, %v525
    %v571 = vpack.c.bf16 %v529, %v526
    %v572 = vpack.c.bf16 %v533, %v530
    %v573 = vpack.c.bf16 %v534, %v531
    %v574 = vpack.c.bf16 %v535, %v532
    %v575 = vpack.c.bf16 %v539, %v536
    %v576 = vpack.c.bf16 %v540, %v537
    %v577 = vpack.c.bf16 %v541, %v538
    %v578 = vpack.c.bf16 %v545, %v542
    %v579 = vpack.c.bf16 %v546, %v543
    %v580 = vpack.c.bf16 %v547, %v544
    %v581 = vpack.c.bf16 %v551, %v548
    %v582 = vpack.c.bf16 %v552, %v549
    %v583 = vpack.c.bf16 %v553, %v550
    %v584 = vpack.c.bf16 %v557, %v554
    %v585 = vpack.c.bf16 %v558, %v555
    %v586 = vpack.c.bf16 %v559, %v556
    %v587 = vpack.c.bf16 %v563, %v560
    %v588 = vpack.c.bf16 %v564, %v561
    %v589 = vpack.c.bf16 %v565, %v562
    %v590 = vld [vmem:[%s5] sm:$0xf]
    %v591 = vld [vmem:[%s5 + $0x4] sm:$0xf]
    %v592 = vld [vmem:[%s5 + $0x8] sm:$0xf]
    %v593 = vld [vmem:[%s5 + $0xc] sm:$0xf]
    %v594 = vld [vmem:[%s5 + $0x10] sm:$0xf]
    %v595 = vld [vmem:[%s5 + $0x14] sm:$0xf]
    %v596 = vld [vmem:[%s5 + $0x18] sm:$0xf]
    %v597 = vld [vmem:[%s5 + $0x1c] sm:$0xf]
    %v598 = vld [vmem:[%s5 + $0x20] sm:$0xf]
    %v599 = vld [vmem:[%s5 + $0x24] sm:$0xf]
    %v600 = vld [vmem:[%s5 + $0x28] sm:$0xf]
    %v601 = vld [vmem:[%s5 + $0x2c] sm:$0xf]
    %v602 = vld [vmem:[%s5 + $0x30] sm:$0xf]
    %v603 = vld [vmem:[%s5 + $0x34] sm:$0xf]
    %v604 = vld [vmem:[%s5 + $0x38] sm:$0xf]
    %v605 = vld [vmem:[%s5 + $0x3c] sm:$0xf]
    %v606 = vld [vmem:[%s5 + $0x40] sm:$0xf]
    %v607 = vld [vmem:[%s5 + $0x44] sm:$0xf]
    %v608 = vld [vmem:[%s5 + $0x48] sm:$0xf]
    %v609 = vld [vmem:[%s5 + $0x4c] sm:$0xf]
    %v610 = vld [vmem:[%s5 + $0x50] sm:$0xf]
    %v611 = vld [vmem:[%s5 + $0x54] sm:$0xf]
    %v612 = vld [vmem:[%s5 + $0x58] sm:$0xf]
    %v613 = vld [vmem:[%s5 + $0x5c] sm:$0xf]
    %v614 = vld [vmem:[%s5 + $0x60] sm:$0xf]
    %v615 = vld [vmem:[%s5 + $0x64] sm:$0xf]
    %v616 = vld [vmem:[%s5 + $0x68] sm:$0xf]
    %v617 = vld [vmem:[%s5 + $0x6c] sm:$0xf]
    %v618 = vld [vmem:[%s5 + $0x70] sm:$0xf]
    %v619 = vld [vmem:[%s5 + $0x74] sm:$0xf]
    %v620 = vld [vmem:[%s5 + $0x78] sm:$0xf]
    %v621 = vld [vmem:[%s5 + $0x7c] sm:$0xf]
    %v622 = vld [vmem:[%s5 + $0x80] sm:$0xf]
    %v623 = vld [vmem:[%s5 + $0x84] sm:$0xf]
    %v624 = vld [vmem:[%s5 + $0x88] sm:$0xf]
    %v625 = vld [vmem:[%s5 + $0x8c] sm:$0xf]
    %v626 = vld [vmem:[%s5 + $0x90] sm:$0xf]
    %v627 = vld [vmem:[%s5 + $0x94] sm:$0xf]
    %v628 = vld [vmem:[%s5 + $0x98] sm:$0xf]
    %v629 = vld [vmem:[%s5 + $0x9c] sm:$0xf]
    %v630 = vld [vmem:[%s5 + $0xa0] sm:$0xf]
    %v631 = vld [vmem:[%s5 + $0xa4] sm:$0xf]
    %v632 = vld [vmem:[%s5 + $0xa8] sm:$0xf]
    %v633 = vld [vmem:[%s5 + $0xac] sm:$0xf]
    %v634 = vld [vmem:[%s5 + $0xb0] sm:$0xf]
    %v635 = vld [vmem:[%s5 + $0xb4] sm:$0xf]
    %v636 = vld [vmem:[%s5 + $0xb8] sm:$0xf]
    %v637 = vld [vmem:[%s5 + $0xbc] sm:$0xf]
    %v638 = vld [vmem:[%s6] sm:$0x1]
    %v640 = vperm.slane %v638, 0
    %v690 = vunpack.c.l.b16 %v590
    %v691 = vunpack.c.l.b16 %v591
    %v692 = vunpack.c.l.b16 %v592
    %v693 = vunpack.c.l.b16 %v593
    %v694 = vunpack.c.l.b16 %v594
    %v695 = vunpack.c.l.b16 %v595
    %v696 = vunpack.c.l.b16 %v596
    %v697 = vunpack.c.l.b16 %v597
    %v698 = vunpack.c.l.b16 %v598
    %v699 = vunpack.c.l.b16 %v599
    %v700 = vunpack.c.l.b16 %v600
    %v701 = vunpack.c.l.b16 %v601
    %v702 = vunpack.c.l.b16 %v602
    %v703 = vunpack.c.l.b16 %v603
    %v704 = vunpack.c.l.b16 %v604
    %v705 = vunpack.c.l.b16 %v605
    %v706 = vunpack.c.l.b16 %v606
    %v707 = vunpack.c.l.b16 %v607
    %v708 = vunpack.c.l.b16 %v608
    %v709 = vunpack.c.l.b16 %v609
    %v710 = vunpack.c.l.b16 %v610
    %v711 = vunpack.c.l.b16 %v611
    %v712 = vunpack.c.l.b16 %v612
    %v713 = vunpack.c.l.b16 %v613
    %v714 = vunpack.c.l.b16 %v614
    %v715 = vunpack.c.l.b16 %v615
    %v716 = vunpack.c.l.b16 %v616
    %v717 = vunpack.c.l.b16 %v617
    %v718 = vunpack.c.l.b16 %v618
    %v719 = vunpack.c.l.b16 %v619
    %v720 = vunpack.c.l.b16 %v620
    %v721 = vunpack.c.l.b16 %v621
    %v722 = vunpack.c.l.b16 %v622
    %v723 = vunpack.c.l.b16 %v623
    %v724 = vunpack.c.l.b16 %v624
    %v725 = vunpack.c.l.b16 %v625
    %v726 = vunpack.c.l.b16 %v626
    %v727 = vunpack.c.l.b16 %v627
    %v728 = vunpack.c.l.b16 %v628
    %v729 = vunpack.c.l.b16 %v629
    %v730 = vunpack.c.l.b16 %v630
    %v731 = vunpack.c.l.b16 %v631
    %v732 = vunpack.c.l.b16 %v632
    %v733 = vunpack.c.l.b16 %v633
    %v734 = vunpack.c.l.b16 %v634
    %v735 = vunpack.c.l.b16 %v635
    %v736 = vunpack.c.l.b16 %v636
    %v737 = vunpack.c.l.b16 %v637
    %v738 = vpack.c.b16 %v691, %v690
    %v739 = vpack.c.b16 %v693, %v692
    %v740 = vpack.c.b16 %v695, %v694
    %v741 = vpack.c.b16 %v697, %v696
    %v742 = vpack.c.b16 %v699, %v698
    %v743 = vpack.c.b16 %v701, %v700
    %v744 = vpack.c.b16 %v703, %v702
    %v745 = vpack.c.b16 %v705, %v704
    %v746 = vpack.c.b16 %v707, %v706
    %v747 = vpack.c.b16 %v709, %v708
    %v748 = vpack.c.b16 %v711, %v710
    %v749 = vpack.c.b16 %v713, %v712
    %v750 = vpack.c.b16 %v715, %v714
    %v751 = vpack.c.b16 %v717, %v716
    %v752 = vpack.c.b16 %v719, %v718
    %v753 = vpack.c.b16 %v721, %v720
    %v754 = vpack.c.b16 %v723, %v722
    %v755 = vpack.c.b16 %v725, %v724
    %v756 = vpack.c.b16 %v727, %v726
    %v757 = vpack.c.b16 %v729, %v728
    %v758 = vpack.c.b16 %v731, %v730
    %v759 = vpack.c.b16 %v733, %v732
    %v760 = vpack.c.b16 %v735, %v734
    %v761 = vpack.c.b16 %v737, %v736
    %786 = vmatpush.bf16.msra.mxu0 %v745
    %787 = vmatpush.bf16.msra.mxu0 %v744
    %788 = vmatpush.bf16.msra.mxu0 %v743
    %789 = vmatpush.bf16.msra.mxu0 %v742
    %790 = vmatpush.bf16.msra.mxu0 %v741
    %791 = vmatpush.bf16.msra.mxu0 %v740
    %792 = vmatpush.bf16.msra.mxu0 %v739
    %793 = vmatpush.bf16.msra.mxu0 %v738
    %794 = vmatmul.bf16.gmra.mxu0 %v566
    %v795 = vpop.f32.mrf.mxu0
    %v796 = vadd.f32 %v640, %v795
    %v797 = vpop.f32.mrf.mxu0
    %v798 = vadd.f32 %v640, %v797
    %799 = vmatmul.bf16.gmra.mxu0 %v569
    %v800 = vpop.f32.mrf.mxu0
    %v801 = vadd.f32 %v640, %v800
    %v802 = vpop.f32.mrf.mxu0
    %v803 = vadd.f32 %v640, %v802
    %804 = vmatmul.bf16.gmra.mxu0 %v572
    %v805 = vpop.f32.mrf.mxu0
    %v806 = vadd.f32 %v640, %v805
    %v807 = vpop.f32.mrf.mxu0
    %v808 = vadd.f32 %v640, %v807
    %809 = vmatmul.bf16.gmra.mxu0 %v575
    %v810 = vpop.f32.mrf.mxu0
    %v811 = vadd.f32 %v640, %v810
    %v812 = vpop.f32.mrf.mxu0
    %v813 = vadd.f32 %v640, %v812
    %814 = vmatmul.bf16.gmra.mxu0 %v578
    %v815 = vpop.f32.mrf.mxu0
    %v816 = vadd.f32 %v640, %v815
    %v817 = vpop.f32.mrf.mxu0
    %v818 = vadd.f32 %v640, %v817
    %819 = vmatmul.bf16.gmra.mxu0 %v581
    %v820 = vpop.f32.mrf.mxu0
    %v821 = vadd.f32 %v640, %v820
    %v822 = vpop.f32.mrf.mxu0
    %v823 = vadd.f32 %v640, %v822
    %824 = vmatmul.bf16.gmra.mxu0 %v584
    %v825 = vpop.f32.mrf.mxu0
    %v826 = vadd.f32 %v640, %v825
    %v827 = vpop.f32.mrf.mxu0
    %v828 = vadd.f32 %v640, %v827
    %829 = vmatmul.bf16.gmra.mxu0 %v587
    %v830 = vpop.f32.mrf.mxu0
    %v831 = vadd.f32 %v640, %v830
    %v832 = vpop.f32.mrf.mxu0
    %v833 = vadd.f32 %v640, %v832
    %834 = vdwg.mxu0
    %835 = vmatpush.bf16.msra.mxu0 %v753
    %836 = vmatpush.bf16.msra.mxu0 %v752
    %837 = vmatpush.bf16.msra.mxu0 %v751
    %838 = vmatpush.bf16.msra.mxu0 %v750
    %839 = vmatpush.bf16.msra.mxu0 %v749
    %840 = vmatpush.bf16.msra.mxu0 %v748
    %841 = vmatpush.bf16.msra.mxu0 %v747
    %842 = vmatpush.bf16.msra.mxu0 %v746
    %843 = vmatmul.bf16.gmra.mxu0 %v567
    %v844 = vpop.f32.mrf.mxu0
    %v845 = vadd.f32 %v796, %v844
    %v846 = vpop.f32.mrf.mxu0
    %v847 = vadd.f32 %v798, %v846
    %848 = vmatmul.bf16.gmra.mxu0 %v570
    %v849 = vpop.f32.mrf.mxu0
    %v850 = vadd.f32 %v801, %v849
    %v851 = vpop.f32.mrf.mxu0
    %v852 = vadd.f32 %v803, %v851
    %853 = vmatmul.bf16.gmra.mxu0 %v573
    %v854 = vpop.f32.mrf.mxu0
    %v855 = vadd.f32 %v806, %v854
    %v856 = vpop.f32.mrf.mxu0
    %v857 = vadd.f32 %v808, %v856
    %858 = vmatmul.bf16.gmra.mxu0 %v576
    %v859 = vpop.f32.mrf.mxu0
    %v860 = vadd.f32 %v811, %v859
    %v861 = vpop.f32.mrf.mxu0
    %v862 = vadd.f32 %v813, %v861
    %863 = vmatmul.bf16.gmra.mxu0 %v579
    %v864 = vpop.f32.mrf.mxu0
    %v865 = vadd.f32 %v816, %v864
    %v866 = vpop.f32.mrf.mxu0
    %v867 = vadd.f32 %v818, %v866
    %868 = vmatmul.bf16.gmra.mxu0 %v582
    %v869 = vpop.f32.mrf.mxu0
    %v870 = vadd.f32 %v821, %v869
    %v871 = vpop.f32.mrf.mxu0
    %v872 = vadd.f32 %v823, %v871
    %873 = vmatmul.bf16.gmra.mxu0 %v585
    %v874 = vpop.f32.mrf.mxu0
    %v875 = vadd.f32 %v826, %v874
    %v876 = vpop.f32.mrf.mxu0
    %v877 = vadd.f32 %v828, %v876
    %878 = vmatmul.bf16.gmra.mxu0 %v588
    %v879 = vpop.f32.mrf.mxu0
    %v880 = vadd.f32 %v831, %v879
    %v881 = vpop.f32.mrf.mxu0
    %v882 = vadd.f32 %v833, %v881
    %883 = vdwg.mxu0
    %884 = vmatpush.bf16.msra.mxu0 %v761
    %885 = vmatpush.bf16.msra.mxu0 %v760
    %886 = vmatpush.bf16.msra.mxu0 %v759
    %887 = vmatpush.bf16.msra.mxu0 %v758
    %888 = vmatpush.bf16.msra.mxu0 %v757
    %889 = vmatpush.bf16.msra.mxu0 %v756
    %890 = vmatpush.bf16.msra.mxu0 %v755
    %891 = vmatpush.bf16.msra.mxu0 %v754
    %892 = vmatmul.bf16.gmra.mxu0 %v568
    %v893 = vpop.f32.mrf.mxu0
    %v894 = vadd.f32 %v845, %v893
    %v895 = vpop.f32.mrf.mxu0
    %v896 = vadd.f32 %v847, %v895
    %897 = vmatmul.bf16.gmra.mxu0 %v571
    %v898 = vpop.f32.mrf.mxu0
    %v899 = vadd.f32 %v850, %v898
    %v900 = vpop.f32.mrf.mxu0
    %v901 = vadd.f32 %v852, %v900
    %902 = vmatmul.bf16.gmra.mxu0 %v574
    %v903 = vpop.f32.mrf.mxu0
    %v904 = vadd.f32 %v855, %v903
    %v905 = vpop.f32.mrf.mxu0
    %v906 = vadd.f32 %v857, %v905
    %907 = vmatmul.bf16.gmra.mxu0 %v577
    %v908 = vpop.f32.mrf.mxu0
    %v909 = vadd.f32 %v860, %v908
    %v910 = vpop.f32.mrf.mxu0
    %v911 = vadd.f32 %v862, %v910
    %912 = vmatmul.bf16.gmra.mxu0 %v580
    %v913 = vpop.f32.mrf.mxu0
    %v914 = vadd.f32 %v865, %v913
    %v915 = vpop.f32.mrf.mxu0
    %v916 = vadd.f32 %v867, %v915
    %917 = vmatmul.bf16.gmra.mxu0 %v583
    %v918 = vpop.f32.mrf.mxu0
    %v919 = vadd.f32 %v870, %v918
    %v920 = vpop.f32.mrf.mxu0
    %v921 = vadd.f32 %v872, %v920
    %922 = vmatmul.bf16.gmra.mxu0 %v586
    %v923 = vpop.f32.mrf.mxu0
    %v924 = vadd.f32 %v875, %v923
    %v925 = vpop.f32.mrf.mxu0
    %v926 = vadd.f32 %v877, %v925
    %927 = vmatmul.bf16.gmra.mxu0 %v589
    %v928 = vpop.f32.mrf.mxu0
    %v929 = vadd.f32 %v880, %v928
    %v930 = vpop.f32.mrf.mxu0
    %v931 = vadd.f32 %v882, %v930
    %932 = vdwg.mxu0
    %v933 = vmax.f32 %v894, 0.0
    %v934 = vmax.f32 %v896, 0.0
    %v935 = vmax.f32 %v899, 0.0
    %v936 = vmax.f32 %v901, 0.0
    %v937 = vmax.f32 %v904, 0.0
    %v938 = vmax.f32 %v906, 0.0
    %v939 = vmax.f32 %v909, 0.0
    %v940 = vmax.f32 %v911, 0.0
    %v941 = vmax.f32 %v914, 0.0
    %v942 = vmax.f32 %v916, 0.0
    %v943 = vmax.f32 %v919, 0.0
    %v944 = vmax.f32 %v921, 0.0
    %v945 = vmax.f32 %v924, 0.0
    %v946 = vmax.f32 %v926, 0.0
    %v947 = vmax.f32 %v929, 0.0
    %v948 = vmax.f32 %v931, 0.0
    %949 = vst [vmem:[%s7] sm:$0xff] %v933
    %950 = vst [vmem:[%s7 + $0x8] sm:$0xff] %v934
    %951 = vst [vmem:[%s7 + $0x10] sm:$0xff] %v935
    %952 = vst [vmem:[%s7 + $0x18] sm:$0xff] %v936
    %953 = vst [vmem:[%s7 + $0x20] sm:$0xff] %v937
    %954 = vst [vmem:[%s7 + $0x28] sm:$0xff] %v938
    %955 = vst [vmem:[%s7 + $0x30] sm:$0xff] %v939
    %956 = vst [vmem:[%s7 + $0x38] sm:$0xff] %v940
    %957 = vst [vmem:[%s7 + $0x40] sm:$0xff] %v941
    %958 = vst [vmem:[%s7 + $0x48] sm:$0xff] %v942
    %959 = vst [vmem:[%s7 + $0x50] sm:$0xff] %v943
    %960 = vst [vmem:[%s7 + $0x58] sm:$0xff] %v944
    %961 = vst [vmem:[%s7 + $0x60] sm:$0xff] %v945
    %962 = vst [vmem:[%s7 + $0x68] sm:$0xff] %v946
    %963 = vst [vmem:[%s7 + $0x70] sm:$0xff] %v947
    %964 = vst [vmem:[%s7 + $0x78] sm:$0xff] %v948
  $region41: #{graphsage_forward.3} parent=0 // pred_fallthru
    _
  // Predicated region
  $region42: #{graphsage_forward.3} parent=0 // pred_check
    _
  $region43: #{graphsage_forward.3} parent=0 // pred_check_branch
    %966 = sbr.rel (0) target = $region45
  $region44: #{graphsage_forward.3} parent=0 // pred_region
    _
  $region45: #{graphsage_forward.3} parent=0 // pred_fallthru
    _
  // Predicated region
  $region46: #{graphsage_forward.3} parent=0 // pred_check
    _
  $region47: #{graphsage_forward.3} parent=0 // pred_check_branch
    %968 = sbr.rel (0) target = $region49
  $region48: #{graphsage_forward.3} parent=0 // pred_region
    _
  $region49: #{graphsage_forward.3} parent=0 // pred_fallthru
    _

</llo_original>
